<compile_context>
chip_gen: v5e
topology: v5e:2x2
jax: 0.10.0
libtpu: 0.0.40
codegen_flags: <defaults>
</compile_context>

<pallas_src>
import functools

import jax
import jax.numpy as jnp
from jax import lax
from jax.experimental import pallas as pl
from jax.experimental.pallas import tpu as pltpu

_LEFT_HALO = 128  # lane-aligned left halo: interior starts on a (8,128) tile boundary


def _resblock_kernel(x_ref, w1_ref, b1_ref, w2_ref, wd_ref, scale_ref,
                     o_ref, padbuf, *, W, NB):
    # x_ref    : (NB, Cin, HW)    NB images, channels-first, flat spatial
    # w1_ref   : (9, Cout, Cin)   conv1 taps, tap index t = 3*dh + dw
    # b1_ref   : (Cout, 1)        conv1 bias
    # w2_ref   : (9, Cout, Cout)  conv2 taps (no bias)
    # wd_ref   : (Cout, Cin)      1x1 downsample weight (no bias)
    # scale_ref: (1, 1) SMEM      residual scale parameter
    # o_ref    : (NB, Cout, HW)   output block (already NCHW-flat)
    # padbuf   : VMEM (Cmax, 128 + HW + W + 1) flat-padded feature scratch
    HW = x_ref.shape[2]
    PL = _LEFT_HALO

    # One-time init: halo strips (whole scratch, for simplicity) zeroed only on
    # the first grid step.  The scratch persists across grid iterations and the
    # interior stores below never touch the strips, so they stay zero forever.
    @pl.when(pl.program_id(0) == 0)
    def _():
        padbuf[...] = jnp.zeros_like(padbuf)

    # Edge masks built in-kernel (no HBM input / extra DMA).  jnp.where keeps
    # border-adjacent non-finite inputs from producing NaN (unlike *0.0).
    col = lax.broadcasted_iota(jnp.int32, (1, HW), 1) % W
    not_left = col != 0          # kills taps reading column w-1 when w == 0
    not_right = col != (W - 1)   # kills taps reading column w+1 when w == W-1

    def conv3x3(feat, w_taps_ref):
        # feat: (C, HW) value -> (Cout, HW) f32
        C = feat.shape[0]
        # Interior starts at lane PL=128: unmasked, tile-aligned store.
        padbuf[0:C, PL:PL + HW] = feat
        acc = None
        for dh in range(3):
            for dw in range(3):
                start = PL + (dh - 1) * W + (dw - 1)
                p = padbuf[0:C, start:start + HW]          # shifted lane-slice
                if dw == 0:
                    p = jnp.where(not_left, p, 0.0)
                elif dw == 2:
                    p = jnp.where(not_right, p, 0.0)
                d = jnp.dot(w_taps_ref[3 * dh + dw], p,
                            preferred_element_type=jnp.float32)
                acc = d if acc is None else acc + d        # first tap inits acc
        return acc

    def one_image(i, carry):
        x = x_ref[i]                                             # (Cin, HW)
        # conv1: 3x3, pad 1, bias, ReLU
        h1 = jnp.maximum(conv3x3(x, w1_ref) + b1_ref[...], 0.0)
        # conv2: 3x3, pad 1, no bias, ReLU
        h2 = jnp.maximum(conv3x3(h1, w2_ref), 0.0)
        # downsample: 1x1 conv (no bias), scaled, residual add
        ds = jnp.dot(wd_ref[...], x, preferred_element_type=jnp.float32)
        out = h2 + ds * scale_ref[0, 0]
        # leaky_relu (torch default negative_slope = 0.01)
        o_ref[i] = jnp.where(out >= 0.0, out, 0.01 * out)
        return carry

    lax.fori_loop(0, NB, one_image, None, unroll=True)


def _pick_images_per_step(n):
    """Images per grid step: amortize the ~0.35us per-step overhead (larger NB)
    while keeping >= 2 grid steps so both v7x TensorCores get work."""
    for nb in (8, 4, 2):
        if n % nb == 0 and n // nb >= 2:
            return nb
    return 1


def resblock_forward(x_nchw, w1_oihw, b1, w2_oihw, wd_oihw, scale):
    """x_nchw:(N,Cin,H,W) f32; w1:(Cout,Cin,3,3); b1:(Cout,); w2:(Cout,Cout,3,3);
    wd:(Cout,Cin,1,1); scale:(1,). Returns (N,Cout,H,W) f32 (NCHW)."""
    N, Cin, H, W = x_nchw.shape
    Cout = w1_oihw.shape[0]
    HW = H * W
    Cmax = max(Cin, Cout)
    NB = _pick_images_per_step(N)
    pad_len = _LEFT_HALO + HW + (W + 1)

    x_flat = x_nchw.reshape(N, Cin, HW)                                # free reshape
    w1_t = jnp.transpose(w1_oihw, (2, 3, 0, 1)).reshape(9, Cout, Cin)  # (t,co,ci)
    w2_t = jnp.transpose(w2_oihw, (2, 3, 0, 1)).reshape(9, Cout, Cout)
    wd_m = wd_oihw.reshape(Cout, Cin)
    b1_c = b1.reshape(Cout, 1).astype(jnp.float32)
    scale_2d = scale.reshape(1, 1).astype(jnp.float32)

    # Explicit VMEM budget: padbuf + double-buffered x/out blocks + weights,
    # 2x headroom, floored at 16 MiB (v5e's default scoped limit).
    vmem_need = 4 * (Cmax * pad_len
                     + 2 * NB * (Cin + Cout) * HW
                     + 9 * Cout * (Cin + Cout) + 2 * Cout * (1 + Cin))
    vmem_limit = min(max(2 * vmem_need, 16 * 1024 * 1024), 100 * 1024 * 1024)

    grid_spec = pltpu.PrefetchScalarGridSpec(
        num_scalar_prefetch=0,
        grid=(N // NB,),
        in_specs=[
            pl.BlockSpec((NB, Cin, HW), lambda n: (n, 0, 0)),     # x (NB images)
            pl.BlockSpec((9, Cout, Cin), lambda n: (0, 0, 0)),    # w1 taps
            pl.BlockSpec((Cout, 1), lambda n: (0, 0)),            # b1
            pl.BlockSpec((9, Cout, Cout), lambda n: (0, 0, 0)),   # w2 taps
            pl.BlockSpec((Cout, Cin), lambda n: (0, 0)),          # wd
            pl.BlockSpec(memory_space=pltpu.MemorySpace.SMEM),    # scale
        ],
        out_specs=pl.BlockSpec((NB, Cout, HW), lambda n: (n, 0, 0)),
        scratch_shapes=[pltpu.VMEM((Cmax, pad_len), jnp.float32)],
    )
    out_flat = pl.pallas_call(
        functools.partial(_resblock_kernel, W=W, NB=NB),
        out_shape=jax.ShapeDtypeStruct((N, Cout, HW), jnp.float32),
        grid_spec=grid_spec,
        compiler_params=pltpu.CompilerParams(
            dimension_semantics=("parallel",),
            vmem_limit_bytes=vmem_limit),
    )(x_flat, w1_t, b1_c, w2_t, wd_m, scale_2d)
    return out_flat.reshape(N, Cout, H, W)


def _resblock_reference(x_nchw, w1_oihw, b1, w2_oihw, wd_oihw, scale):
    """Pure-JAX reference using lax conv in NCHW / OIHW."""
    dn = ("NCHW", "OIHW", "NCHW")
    h1 = lax.conv_general_dilated(x_nchw, w1_oihw, (1, 1), ((1, 1), (1, 1)),
                                  dimension_numbers=dn) + b1.reshape(1, -1, 1, 1)
    h1 = jnp.maximum(h1, 0.0)
    h2 = lax.conv_general_dilated(h1, w2_oihw, (1, 1), ((1, 1), (1, 1)),
                                  dimension_numbers=dn)
    h2 = jnp.maximum(h2, 0.0)
    ds = lax.conv_general_dilated(x_nchw, wd_oihw, (1, 1), ((0, 0), (0, 0)),
                                  dimension_numbers=dn)
    out = h2 + ds * scale[0]
    return jnp.where(out >= 0.0, out, 0.01 * out)


def _make_inputs(key, N, Cin, Cout, H, W):
    k = jax.random.split(key, 6)
    # PyTorch conventions: NCHW input, OIHW weights (used directly).
    x = jax.random.normal(k[0], (N, Cin, H, W), jnp.float32)
    w1 = jax.random.normal(k[1], (Cout, Cin, 3, 3), jnp.float32) * 0.1
    b1 = jax.random.normal(k[2], (Cout,), jnp.float32) * 0.1
    w2 = jax.random.normal(k[3], (Cout, Cout, 3, 3), jnp.float32) * 0.1
    wd = jax.random.normal(k[4], (Cout, Cin, 1, 1), jnp.float32) * 0.1
    # torch initializes scale to zeros(1); use a nonzero deterministic value so
    # the residual/downsample path is exercised (forward semantics identical).
    scale = jax.random.normal(k[5], (1,), jnp.float32)
    return x, w1, b1, w2, wd, scale


if __name__ == "__main__":
    key0, key1 = jax.random.split(jax.random.PRNGKey(0))

    # Spec-sized config: N=2, Cin=4, Cout=8, 16x16  ->  NB=1, grid=(2,)
    args_a = _make_inputs(key0, 2, 4, 8, 16, 16)
    out_a = jax.block_until_ready(resblock_forward(*args_a))
    ref_a = _resblock_reference(*args_a)
    assert out_a.shape == (2, 8, 16, 16)
    assert jnp.allclose(out_a, ref_a, atol=1e-4, rtol=1e-4), \
        float(jnp.max(jnp.abs(out_a - ref_a)))

    # Batched-path check: N=8  ->  NB=4 images per grid step, grid=(2,)
    args_b = _make_inputs(key1, 8, 4, 8, 16, 16)
    out_b = jax.block_until_ready(resblock_forward(*args_b))
    ref_b = _resblock_reference(*args_b)
    assert out_b.shape == (8, 8, 16, 16)
    assert jnp.allclose(out_b, ref_b, atol=1e-4, rtol=1e-4), \
        float(jnp.max(jnp.abs(out_b - ref_b)))

    print("KERNEL_OK")
</pallas_src>

<mosaic_0001>
module attributes {stable_mosaic.version = 11 : i64} {
  func.func @_resblock_kernel(%arg0: i32, %arg1: memref<1x4x256xf32, #tpu.memory_space<vmem>>, %arg2: memref<9x8x4xf32, #tpu.memory_space<vmem>>, %arg3: memref<8x1xf32, #tpu.memory_space<vmem>>, %arg4: memref<9x8x8xf32, #tpu.memory_space<vmem>>, %arg5: memref<8x4xf32, #tpu.memory_space<vmem>>, %arg6: memref<1x1xf32, #tpu.memory_space<smem>>, %arg7: memref<1x8x256xf32, #tpu.memory_space<vmem>>, %arg8: memref<8x401xf32, #tpu.memory_space<vmem>>) attributes {dimension_semantics = [#tpu.dimension_semantics<parallel>], iteration_bounds = array<i64: 2>, scalar_prefetch = 0 : i64, scratch_operands = 1 : i64, tpu.core_type = #tpu.core_type<tc>, window_params = [{transform_indices = @transform_0, window_bounds = array<i64: 1, 4, 256>}, {pipeline_mode = #tpu.pipeline_mode<synchronous>, transform_indices = @transform_1, window_bounds = array<i64: 9, 8, 4>}, {pipeline_mode = #tpu.pipeline_mode<synchronous>, transform_indices = @transform_2, window_bounds = array<i64: 8, 1>}, {pipeline_mode = #tpu.pipeline_mode<synchronous>, transform_indices = @transform_3, window_bounds = array<i64: 9, 8, 8>}, {pipeline_mode = #tpu.pipeline_mode<synchronous>, transform_indices = @transform_4, window_bounds = array<i64: 8, 4>}, {transform_indices = @transform_5, window_bounds = array<i64: 1, 1>}, {transform_indices = @transform_6, window_bounds = array<i64: 1, 8, 256>}]} {
    %c0_i32 = arith.constant 0 : i32
    %0 = arith.cmpi eq, %arg0, %c0_i32 : i32
    %1 = arith.extui %0 : i1 to i32
    %c0_i32_0 = arith.constant 0 : i32
    %2 = arith.cmpi ne, %1, %c0_i32_0 : i32
    scf.if %2 {
      %cst_128 = arith.constant 0.000000e+00 : f32
      %187 = vector.broadcast %cst_128 : f32 to vector<8x401xf32>
      %c0_129 = arith.constant 0 : index
      %c0_130 = arith.constant 0 : index
      %188 = vector.load %arg8[%c0_129, %c0_130] : memref<8x401xf32, #tpu.memory_space<vmem>>, vector<8x401xf32>
      tpu.vector_store %arg8[%c0_129, %c0_130], %187 {strides = array<i32>} : memref<8x401xf32, #tpu.memory_space<vmem>>, vector<8x401xf32>,
    } else {
    }
    %3 = tpu.iota {dimensions = array<i32: 1>} : vector<1x256xi32>
    %c16_i32 = arith.constant 16 : i32
    %c0_i32_1 = arith.constant 0 : i32
    %4 = arith.cmpi eq, %c16_i32, %c0_i32_1 : i32
    %c1_i32 = arith.constant 1 : i32
    %5 = arith.select %4, %c1_i32, %c16_i32 : i32
    %6 = vector.broadcast %5 : i32 to vector<1x256xi32>
    %7 = arith.remsi %3, %6 : vector<1x256xi32>
    %c0_i32_2 = arith.constant 0 : i32
    %8 = vector.broadcast %c0_i32_2 : i32 to vector<1x256xi32>
    %9 = arith.cmpi ne, %7, %8 : vector<1x256xi32>
    %c0_i32_3 = arith.constant 0 : i32
    %10 = vector.broadcast %c0_i32_3 : i32 to vector<1x256xi32>
    %11 = arith.cmpi slt, %7, %10 : vector<1x256xi32>
    %c0_i32_4 = arith.constant 0 : i32
    %12 = arith.cmpi slt, %5, %c0_i32_4 : i32
    %13 = vector.broadcast %12 : i1 to vector<1x256xi1>
    %14 = vector.broadcast %13 : vector<1x256xi1> to vector<1x256xi1>
    %15 = arith.xori %11, %14 : vector<1x256xi1>
    %16 = arith.andi %15, %9 : vector<1x256xi1>
    %17 = vector.broadcast %5 : i32 to vector<1x256xi32>
    %18 = arith.addi %7, %17 : vector<1x256xi32>
    %19 = arith.select %16, %18, %7 : vector<1x256xi1>, vector<1x256xi32>
    %c0_i32_5 = arith.constant 0 : i32
    %20 = vector.broadcast %c0_i32_5 : i32 to vector<1x256xi32>
    %21 = arith.cmpi ne, %19, %20 : vector<1x256xi32>
    %c15_i32 = arith.constant 15 : i32
    %22 = vector.broadcast %c15_i32 : i32 to vector<1x256xi32>
    %23 = arith.cmpi ne, %19, %22 : vector<1x256xi32>
    %c0_i32_6 = arith.constant 0 : i32
    %24 = arith.index_cast %c0_i32_6 : i32 to index
    %c0 = arith.constant 0 : index
    %c0_7 = arith.constant 0 : index
    %25 = vector.load %arg1[%24, %c0, %c0_7] : memref<1x4x256xf32, #tpu.memory_space<vmem>>, vector<1x4x256xf32>
    %26 = vector.shape_cast %25 : vector<1x4x256xf32> to vector<4x256xf32>
    %c0_8 = arith.constant 0 : index
    %c128 = arith.constant 128 : index
    %27 = vector.load %arg8[%c0_8, %c128] : memref<8x401xf32, #tpu.memory_space<vmem>>, vector<4x256xf32>
    tpu.vector_store %arg8[%c0_8, %c128], %26 {strides = array<i32>} : memref<8x401xf32, #tpu.memory_space<vmem>>, vector<4x256xf32>,
    %c0_9 = arith.constant 0 : index
    %c111 = arith.constant 111 : index
    %28 = vector.load %arg8[%c0_9, %c111] : memref<8x401xf32, #tpu.memory_space<vmem>>, vector<4x256xf32>
    %cst = arith.constant 0.000000e+00 : f32
    %29 = vector.shape_cast %21 : vector<1x256xi1> to vector<1x256xi1>
    %30 = vector.broadcast %29 : vector<1x256xi1> to vector<4x256xi1>
    %31 = vector.broadcast %cst : f32 to vector<4x256xf32>
    %32 = arith.select %30, %28, %31 : vector<4x256xi1>, vector<4x256xf32>
    %c0_10 = arith.constant 0 : index
    %c0_11 = arith.constant 0 : index
    %c0_12 = arith.constant 0 : index
    %33 = vector.load %arg2[%c0_10, %c0_11, %c0_12] : memref<9x8x4xf32, #tpu.memory_space<vmem>>, vector<1x8x4xf32>
    %34 = vector.shape_cast %33 : vector<1x8x4xf32> to vector<8x4xf32>
    %cst_13 = arith.constant dense<0.000000e+00> : vector<8x256xf32>
    %35 = tpu.matmul %34, %32, %cst_13 {dimension_numbers = #tpu.dot_dimension_numbers<[1], [0], [0], [1], [0, 0, 1, 1], [], []>} : vector<8x4xf32>, vector<4x256xf32>, vector<8x256xf32> -> vector<8x256xf32>
    %c0_14 = arith.constant 0 : index
    %c112 = arith.constant 112 : index
    %36 = vector.load %arg8[%c0_14, %c112] : memref<8x401xf32, #tpu.memory_space<vmem>>, vector<4x256xf32>
    %c1 = arith.constant 1 : index
    %c0_15 = arith.constant 0 : index
    %c0_16 = arith.constant 0 : index
    %37 = vector.load %arg2[%c1, %c0_15, %c0_16] : memref<9x8x4xf32, #tpu.memory_space<vmem>>, vector<1x8x4xf32>
    %38 = vector.shape_cast %37 : vector<1x8x4xf32> to vector<8x4xf32>
    %cst_17 = arith.constant dense<0.000000e+00> : vector<8x256xf32>
    %39 = tpu.matmul %38, %36, %cst_17 {dimension_numbers = #tpu.dot_dimension_numbers<[1], [0], [0], [1], [0, 0, 1, 1], [], []>} : vector<8x4xf32>, vector<4x256xf32>, vector<8x256xf32> -> vector<8x256xf32>
    %40 = arith.addf %35, %39 : vector<8x256xf32>
    %c0_18 = arith.constant 0 : index
    %c113 = arith.constant 113 : index
    %41 = vector.load %arg8[%c0_18, %c113] : memref<8x401xf32, #tpu.memory_space<vmem>>, vector<4x256xf32>
    %cst_19 = arith.constant 0.000000e+00 : f32
    %42 = vector.shape_cast %23 : vector<1x256xi1> to vector<1x256xi1>
    %43 = vector.broadcast %42 : vector<1x256xi1> to vector<4x256xi1>
    %44 = vector.broadcast %cst_19 : f32 to vector<4x256xf32>
    %45 = arith.select %43, %41, %44 : vector<4x256xi1>, vector<4x256xf32>
    %c2 = arith.constant 2 : index
    %c0_20 = arith.constant 0 : index
    %c0_21 = arith.constant 0 : index
    %46 = vector.load %arg2[%c2, %c0_20, %c0_21] : memref<9x8x4xf32, #tpu.memory_space<vmem>>, vector<1x8x4xf32>
    %47 = vector.shape_cast %46 : vector<1x8x4xf32> to vector<8x4xf32>
    %cst_22 = arith.constant dense<0.000000e+00> : vector<8x256xf32>
    %48 = tpu.matmul %47, %45, %cst_22 {dimension_numbers = #tpu.dot_dimension_numbers<[1], [0], [0], [1], [0, 0, 1, 1], [], []>} : vector<8x4xf32>, vector<4x256xf32>, vector<8x256xf32> -> vector<8x256xf32>
    %49 = arith.addf %40, %48 : vector<8x256xf32>
    %c0_23 = arith.constant 0 : index
    %c127 = arith.constant 127 : index
    %50 = vector.load %arg8[%c0_23, %c127] : memref<8x401xf32, #tpu.memory_space<vmem>>, vector<4x256xf32>
    %cst_24 = arith.constant 0.000000e+00 : f32
    %51 = vector.shape_cast %21 : vector<1x256xi1> to vector<1x256xi1>
    %52 = vector.broadcast %51 : vector<1x256xi1> to vector<4x256xi1>
    %53 = vector.broadcast %cst_24 : f32 to vector<4x256xf32>
    %54 = arith.select %52, %50, %53 : vector<4x256xi1>, vector<4x256xf32>
    %c3 = arith.constant 3 : index
    %c0_25 = arith.constant 0 : index
    %c0_26 = arith.constant 0 : index
    %55 = vector.load %arg2[%c3, %c0_25, %c0_26] : memref<9x8x4xf32, #tpu.memory_space<vmem>>, vector<1x8x4xf32>
    %56 = vector.shape_cast %55 : vector<1x8x4xf32> to vector<8x4xf32>
    %cst_27 = arith.constant dense<0.000000e+00> : vector<8x256xf32>
    %57 = tpu.matmul %56, %54, %cst_27 {dimension_numbers = #tpu.dot_dimension_numbers<[1], [0], [0], [1], [0, 0, 1, 1], [], []>} : vector<8x4xf32>, vector<4x256xf32>, vector<8x256xf32> -> vector<8x256xf32>
    %58 = arith.addf %49, %57 : vector<8x256xf32>
    %c0_28 = arith.constant 0 : index
    %c128_29 = arith.constant 128 : index
    %59 = vector.load %arg8[%c0_28, %c128_29] : memref<8x401xf32, #tpu.memory_space<vmem>>, vector<4x256xf32>
    %c4 = arith.constant 4 : index
    %c0_30 = arith.constant 0 : index
    %c0_31 = arith.constant 0 : index
    %60 = vector.load %arg2[%c4, %c0_30, %c0_31] : memref<9x8x4xf32, #tpu.memory_space<vmem>>, vector<1x8x4xf32>
    %61 = vector.shape_cast %60 : vector<1x8x4xf32> to vector<8x4xf32>
    %cst_32 = arith.constant dense<0.000000e+00> : vector<8x256xf32>
    %62 = tpu.matmul %61, %59, %cst_32 {dimension_numbers = #tpu.dot_dimension_numbers<[1], [0], [0], [1], [0, 0, 1, 1], [], []>} : vector<8x4xf32>, vector<4x256xf32>, vector<8x256xf32> -> vector<8x256xf32>
    %63 = arith.addf %58, %62 : vector<8x256xf32>
    %c0_33 = arith.constant 0 : index
    %c129 = arith.constant 129 : index
    %64 = vector.load %arg8[%c0_33, %c129] : memref<8x401xf32, #tpu.memory_space<vmem>>, vector<4x256xf32>
    %cst_34 = arith.constant 0.000000e+00 : f32
    %65 = vector.shape_cast %23 : vector<1x256xi1> to vector<1x256xi1>
    %66 = vector.broadcast %65 : vector<1x256xi1> to vector<4x256xi1>
    %67 = vector.broadcast %cst_34 : f32 to vector<4x256xf32>
    %68 = arith.select %66, %64, %67 : vector<4x256xi1>, vector<4x256xf32>
    %c5 = arith.constant 5 : index
    %c0_35 = arith.constant 0 : index
    %c0_36 = arith.constant 0 : index
    %69 = vector.load %arg2[%c5, %c0_35, %c0_36] : memref<9x8x4xf32, #tpu.memory_space<vmem>>, vector<1x8x4xf32>
    %70 = vector.shape_cast %69 : vector<1x8x4xf32> to vector<8x4xf32>
    %cst_37 = arith.constant dense<0.000000e+00> : vector<8x256xf32>
    %71 = tpu.matmul %70, %68, %cst_37 {dimension_numbers = #tpu.dot_dimension_numbers<[1], [0], [0], [1], [0, 0, 1, 1], [], []>} : vector<8x4xf32>, vector<4x256xf32>, vector<8x256xf32> -> vector<8x256xf32>
    %72 = arith.addf %63, %71 : vector<8x256xf32>
    %c0_38 = arith.constant 0 : index
    %c143 = arith.constant 143 : index
    %73 = vector.load %arg8[%c0_38, %c143] : memref<8x401xf32, #tpu.memory_space<vmem>>, vector<4x256xf32>
    %cst_39 = arith.constant 0.000000e+00 : f32
    %74 = vector.shape_cast %21 : vector<1x256xi1> to vector<1x256xi1>
    %75 = vector.broadcast %74 : vector<1x256xi1> to vector<4x256xi1>
    %76 = vector.broadcast %cst_39 : f32 to vector<4x256xf32>
    %77 = arith.select %75, %73, %76 : vector<4x256xi1>, vector<4x256xf32>
    %c6 = arith.constant 6 : index
    %c0_40 = arith.constant 0 : index
    %c0_41 = arith.constant 0 : index
    %78 = vector.load %arg2[%c6, %c0_40, %c0_41] : memref<9x8x4xf32, #tpu.memory_space<vmem>>, vector<1x8x4xf32>
    %79 = vector.shape_cast %78 : vector<1x8x4xf32> to vector<8x4xf32>
    %cst_42 = arith.constant dense<0.000000e+00> : vector<8x256xf32>
    %80 = tpu.matmul %79, %77, %cst_42 {dimension_numbers = #tpu.dot_dimension_numbers<[1], [0], [0], [1], [0, 0, 1, 1], [], []>} : vector<8x4xf32>, vector<4x256xf32>, vector<8x256xf32> -> vector<8x256xf32>
    %81 = arith.addf %72, %80 : vector<8x256xf32>
    %c0_43 = arith.constant 0 : index
    %c144 = arith.constant 144 : index
    %82 = vector.load %arg8[%c0_43, %c144] : memref<8x401xf32, #tpu.memory_space<vmem>>, vector<4x256xf32>
    %c7 = arith.constant 7 : index
    %c0_44 = arith.constant 0 : index
    %c0_45 = arith.constant 0 : index
    %83 = vector.load %arg2[%c7, %c0_44, %c0_45] : memref<9x8x4xf32, #tpu.memory_space<vmem>>, vector<1x8x4xf32>
    %84 = vector.shape_cast %83 : vector<1x8x4xf32> to vector<8x4xf32>
    %cst_46 = arith.constant dense<0.000000e+00> : vector<8x256xf32>
    %85 = tpu.matmul %84, %82, %cst_46 {dimension_numbers = #tpu.dot_dimension_numbers<[1], [0], [0], [1], [0, 0, 1, 1], [], []>} : vector<8x4xf32>, vector<4x256xf32>, vector<8x256xf32> -> vector<8x256xf32>
    %86 = arith.addf %81, %85 : vector<8x256xf32>
    %c0_47 = arith.constant 0 : index
    %c145 = arith.constant 145 : index
    %87 = vector.load %arg8[%c0_47, %c145] : memref<8x401xf32, #tpu.memory_space<vmem>>, vector<4x256xf32>
    %cst_48 = arith.constant 0.000000e+00 : f32
    %88 = vector.shape_cast %23 : vector<1x256xi1> to vector<1x256xi1>
    %89 = vector.broadcast %88 : vector<1x256xi1> to vector<4x256xi1>
    %90 = vector.broadcast %cst_48 : f32 to vector<4x256xf32>
    %91 = arith.select %89, %87, %90 : vector<4x256xi1>, vector<4x256xf32>
    %c8 = arith.constant 8 : index
    %c0_49 = arith.constant 0 : index
    %c0_50 = arith.constant 0 : index
    %92 = vector.load %arg2[%c8, %c0_49, %c0_50] : memref<9x8x4xf32, #tpu.memory_space<vmem>>, vector<1x8x4xf32>
    %93 = vector.shape_cast %92 : vector<1x8x4xf32> to vector<8x4xf32>
    %cst_51 = arith.constant dense<0.000000e+00> : vector<8x256xf32>
    %94 = tpu.matmul %93, %91, %cst_51 {dimension_numbers = #tpu.dot_dimension_numbers<[1], [0], [0], [1], [0, 0, 1, 1], [], []>} : vector<8x4xf32>, vector<4x256xf32>, vector<8x256xf32> -> vector<8x256xf32>
    %95 = arith.addf %86, %94 : vector<8x256xf32>
    %c0_52 = arith.constant 0 : index
    %c0_53 = arith.constant 0 : index
    %96 = vector.load %arg3[%c0_52, %c0_53] : memref<8x1xf32, #tpu.memory_space<vmem>>, vector<8x1xf32>
    %97 = vector.broadcast %96 : vector<8x1xf32> to vector<8x256xf32>
    %98 = arith.addf %95, %97 : vector<8x256xf32>
    %cst_54 = arith.constant 0.000000e+00 : f32
    %99 = vector.broadcast %cst_54 : f32 to vector<8x256xf32>
    %100 = arith.maximumf %98, %99 : vector<8x256xf32>
    %c0_55 = arith.constant 0 : index
    %c128_56 = arith.constant 128 : index
    %101 = vector.load %arg8[%c0_55, %c128_56] : memref<8x401xf32, #tpu.memory_space<vmem>>, vector<8x256xf32>
    tpu.vector_store %arg8[%c0_55, %c128_56], %100 {strides = array<i32>} : memref<8x401xf32, #tpu.memory_space<vmem>>, vector<8x256xf32>,
    %c0_57 = arith.constant 0 : index
    %c111_58 = arith.constant 111 : index
    %102 = vector.load %arg8[%c0_57, %c111_58] : memref<8x401xf32, #tpu.memory_space<vmem>>, vector<8x256xf32>
    %cst_59 = arith.constant 0.000000e+00 : f32
    %103 = vector.shape_cast %21 : vector<1x256xi1> to vector<1x256xi1>
    %104 = vector.broadcast %103 : vector<1x256xi1> to vector<8x256xi1>
    %105 = vector.broadcast %cst_59 : f32 to vector<8x256xf32>
    %106 = arith.select %104, %102, %105 : vector<8x256xi1>, vector<8x256xf32>
    %c0_60 = arith.constant 0 : index
    %c0_61 = arith.constant 0 : index
    %c0_62 = arith.constant 0 : index
    %107 = vector.load %arg4[%c0_60, %c0_61, %c0_62] : memref<9x8x8xf32, #tpu.memory_space<vmem>>, vector<1x8x8xf32>
    %108 = vector.shape_cast %107 : vector<1x8x8xf32> to vector<8x8xf32>
    %cst_63 = arith.constant dense<0.000000e+00> : vector<8x256xf32>
    %109 = tpu.matmul %108, %106, %cst_63 {dimension_numbers = #tpu.dot_dimension_numbers<[1], [0], [0], [1], [0, 0, 1, 1], [], []>} : vector<8x8xf32>, vector<8x256xf32>, vector<8x256xf32> -> vector<8x256xf32>
    %c0_64 = arith.constant 0 : index
    %c112_65 = arith.constant 112 : index
    %110 = vector.load %arg8[%c0_64, %c112_65] : memref<8x401xf32, #tpu.memory_space<vmem>>, vector<8x256xf32>
    %c1_66 = arith.constant 1 : index
    %c0_67 = arith.constant 0 : index
    %c0_68 = arith.constant 0 : index
    %111 = vector.load %arg4[%c1_66, %c0_67, %c0_68] : memref<9x8x8xf32, #tpu.memory_space<vmem>>, vector<1x8x8xf32>
    %112 = vector.shape_cast %111 : vector<1x8x8xf32> to vector<8x8xf32>
    %cst_69 = arith.constant dense<0.000000e+00> : vector<8x256xf32>
    %113 = tpu.matmul %112, %110, %cst_69 {dimension_numbers = #tpu.dot_dimension_numbers<[1], [0], [0], [1], [0, 0, 1, 1], [], []>} : vector<8x8xf32>, vector<8x256xf32>, vector<8x256xf32> -> vector<8x256xf32>
    %114 = arith.addf %109, %113 : vector<8x256xf32>
    %c0_70 = arith.constant 0 : index
    %c113_71 = arith.constant 113 : index
    %115 = vector.load %arg8[%c0_70, %c113_71] : memref<8x401xf32, #tpu.memory_space<vmem>>, vector<8x256xf32>
    %cst_72 = arith.constant 0.000000e+00 : f32
    %116 = vector.shape_cast %23 : vector<1x256xi1> to vector<1x256xi1>
    %117 = vector.broadcast %116 : vector<1x256xi1> to vector<8x256xi1>
    %118 = vector.broadcast %cst_72 : f32 to vector<8x256xf32>
    %119 = arith.select %117, %115, %118 : vector<8x256xi1>, vector<8x256xf32>
    %c2_73 = arith.constant 2 : index
    %c0_74 = arith.constant 0 : index
    %c0_75 = arith.constant 0 : index
    %120 = vector.load %arg4[%c2_73, %c0_74, %c0_75] : memref<9x8x8xf32, #tpu.memory_space<vmem>>, vector<1x8x8xf32>
    %121 = vector.shape_cast %120 : vector<1x8x8xf32> to vector<8x8xf32>
    %cst_76 = arith.constant dense<0.000000e+00> : vector<8x256xf32>
    %122 = tpu.matmul %121, %119, %cst_76 {dimension_numbers = #tpu.dot_dimension_numbers<[1], [0], [0], [1], [0, 0, 1, 1], [], []>} : vector<8x8xf32>, vector<8x256xf32>, vector<8x256xf32> -> vector<8x256xf32>
    %123 = arith.addf %114, %122 : vector<8x256xf32>
    %c0_77 = arith.constant 0 : index
    %c127_78 = arith.constant 127 : index
    %124 = vector.load %arg8[%c0_77, %c127_78] : memref<8x401xf32, #tpu.memory_space<vmem>>, vector<8x256xf32>
    %cst_79 = arith.constant 0.000000e+00 : f32
    %125 = vector.shape_cast %21 : vector<1x256xi1> to vector<1x256xi1>
    %126 = vector.broadcast %125 : vector<1x256xi1> to vector<8x256xi1>
    %127 = vector.broadcast %cst_79 : f32 to vector<8x256xf32>
    %128 = arith.select %126, %124, %127 : vector<8x256xi1>, vector<8x256xf32>
    %c3_80 = arith.constant 3 : index
    %c0_81 = arith.constant 0 : index
    %c0_82 = arith.constant 0 : index
    %129 = vector.load %arg4[%c3_80, %c0_81, %c0_82] : memref<9x8x8xf32, #tpu.memory_space<vmem>>, vector<1x8x8xf32>
    %130 = vector.shape_cast %129 : vector<1x8x8xf32> to vector<8x8xf32>
    %cst_83 = arith.constant dense<0.000000e+00> : vector<8x256xf32>
    %131 = tpu.matmul %130, %128, %cst_83 {dimension_numbers = #tpu.dot_dimension_numbers<[1], [0], [0], [1], [0, 0, 1, 1], [], []>} : vector<8x8xf32>, vector<8x256xf32>, vector<8x256xf32> -> vector<8x256xf32>
    %132 = arith.addf %123, %131 : vector<8x256xf32>
    %c0_84 = arith.constant 0 : index
    %c128_85 = arith.constant 128 : index
    %133 = vector.load %arg8[%c0_84, %c128_85] : memref<8x401xf32, #tpu.memory_space<vmem>>, vector<8x256xf32>
    %c4_86 = arith.constant 4 : index
    %c0_87 = arith.constant 0 : index
    %c0_88 = arith.constant 0 : index
    %134 = vector.load %arg4[%c4_86, %c0_87, %c0_88] : memref<9x8x8xf32, #tpu.memory_space<vmem>>, vector<1x8x8xf32>
    %135 = vector.shape_cast %134 : vector<1x8x8xf32> to vector<8x8xf32>
    %cst_89 = arith.constant dense<0.000000e+00> : vector<8x256xf32>
    %136 = tpu.matmul %135, %133, %cst_89 {dimension_numbers = #tpu.dot_dimension_numbers<[1], [0], [0], [1], [0, 0, 1, 1], [], []>} : vector<8x8xf32>, vector<8x256xf32>, vector<8x256xf32> -> vector<8x256xf32>
    %137 = arith.addf %132, %136 : vector<8x256xf32>
    %c0_90 = arith.constant 0 : index
    %c129_91 = arith.constant 129 : index
    %138 = vector.load %arg8[%c0_90, %c129_91] : memref<8x401xf32, #tpu.memory_space<vmem>>, vector<8x256xf32>
    %cst_92 = arith.constant 0.000000e+00 : f32
    %139 = vector.shape_cast %23 : vector<1x256xi1> to vector<1x256xi1>
    %140 = vector.broadcast %139 : vector<1x256xi1> to vector<8x256xi1>
    %141 = vector.broadcast %cst_92 : f32 to vector<8x256xf32>
    %142 = arith.select %140, %138, %141 : vector<8x256xi1>, vector<8x256xf32>
    %c5_93 = arith.constant 5 : index
    %c0_94 = arith.constant 0 : index
    %c0_95 = arith.constant 0 : index
    %143 = vector.load %arg4[%c5_93, %c0_94, %c0_95] : memref<9x8x8xf32, #tpu.memory_space<vmem>>, vector<1x8x8xf32>
    %144 = vector.shape_cast %143 : vector<1x8x8xf32> to vector<8x8xf32>
    %cst_96 = arith.constant dense<0.000000e+00> : vector<8x256xf32>
    %145 = tpu.matmul %144, %142, %cst_96 {dimension_numbers = #tpu.dot_dimension_numbers<[1], [0], [0], [1], [0, 0, 1, 1], [], []>} : vector<8x8xf32>, vector<8x256xf32>, vector<8x256xf32> -> vector<8x256xf32>
    %146 = arith.addf %137, %145 : vector<8x256xf32>
    %c0_97 = arith.constant 0 : index
    %c143_98 = arith.constant 143 : index
    %147 = vector.load %arg8[%c0_97, %c143_98] : memref<8x401xf32, #tpu.memory_space<vmem>>, vector<8x256xf32>
    %cst_99 = arith.constant 0.000000e+00 : f32
    %148 = vector.shape_cast %21 : vector<1x256xi1> to vector<1x256xi1>
    %149 = vector.broadcast %148 : vector<1x256xi1> to vector<8x256xi1>
    %150 = vector.broadcast %cst_99 : f32 to vector<8x256xf32>
    %151 = arith.select %149, %147, %150 : vector<8x256xi1>, vector<8x256xf32>
    %c6_100 = arith.constant 6 : index
    %c0_101 = arith.constant 0 : index
    %c0_102 = arith.constant 0 : index
    %152 = vector.load %arg4[%c6_100, %c0_101, %c0_102] : memref<9x8x8xf32, #tpu.memory_space<vmem>>, vector<1x8x8xf32>
    %153 = vector.shape_cast %152 : vector<1x8x8xf32> to vector<8x8xf32>
    %cst_103 = arith.constant dense<0.000000e+00> : vector<8x256xf32>
    %154 = tpu.matmul %153, %151, %cst_103 {dimension_numbers = #tpu.dot_dimension_numbers<[1], [0], [0], [1], [0, 0, 1, 1], [], []>} : vector<8x8xf32>, vector<8x256xf32>, vector<8x256xf32> -> vector<8x256xf32>
    %155 = arith.addf %146, %154 : vector<8x256xf32>
    %c0_104 = arith.constant 0 : index
    %c144_105 = arith.constant 144 : index
    %156 = vector.load %arg8[%c0_104, %c144_105] : memref<8x401xf32, #tpu.memory_space<vmem>>, vector<8x256xf32>
    %c7_106 = arith.constant 7 : index
    %c0_107 = arith.constant 0 : index
    %c0_108 = arith.constant 0 : index
    %157 = vector.load %arg4[%c7_106, %c0_107, %c0_108] : memref<9x8x8xf32, #tpu.memory_space<vmem>>, vector<1x8x8xf32>
    %158 = vector.shape_cast %157 : vector<1x8x8xf32> to vector<8x8xf32>
    %cst_109 = arith.constant dense<0.000000e+00> : vector<8x256xf32>
    %159 = tpu.matmul %158, %156, %cst_109 {dimension_numbers = #tpu.dot_dimension_numbers<[1], [0], [0], [1], [0, 0, 1, 1], [], []>} : vector<8x8xf32>, vector<8x256xf32>, vector<8x256xf32> -> vector<8x256xf32>
    %160 = arith.addf %155, %159 : vector<8x256xf32>
    %c0_110 = arith.constant 0 : index
    %c145_111 = arith.constant 145 : index
    %161 = vector.load %arg8[%c0_110, %c145_111] : memref<8x401xf32, #tpu.memory_space<vmem>>, vector<8x256xf32>
    %cst_112 = arith.constant 0.000000e+00 : f32
    %162 = vector.shape_cast %23 : vector<1x256xi1> to vector<1x256xi1>
    %163 = vector.broadcast %162 : vector<1x256xi1> to vector<8x256xi1>
    %164 = vector.broadcast %cst_112 : f32 to vector<8x256xf32>
    %165 = arith.select %163, %161, %164 : vector<8x256xi1>, vector<8x256xf32>
    %c8_113 = arith.constant 8 : index
    %c0_114 = arith.constant 0 : index
    %c0_115 = arith.constant 0 : index
    %166 = vector.load %arg4[%c8_113, %c0_114, %c0_115] : memref<9x8x8xf32, #tpu.memory_space<vmem>>, vector<1x8x8xf32>
    %167 = vector.shape_cast %166 : vector<1x8x8xf32> to vector<8x8xf32>
    %cst_116 = arith.constant dense<0.000000e+00> : vector<8x256xf32>
    %168 = tpu.matmul %167, %165, %cst_116 {dimension_numbers = #tpu.dot_dimension_numbers<[1], [0], [0], [1], [0, 0, 1, 1], [], []>} : vector<8x8xf32>, vector<8x256xf32>, vector<8x256xf32> -> vector<8x256xf32>
    %169 = arith.addf %160, %168 : vector<8x256xf32>
    %cst_117 = arith.constant 0.000000e+00 : f32
    %170 = vector.broadcast %cst_117 : f32 to vector<8x256xf32>
    %171 = arith.maximumf %169, %170 : vector<8x256xf32>
    %c0_118 = arith.constant 0 : index
    %c0_119 = arith.constant 0 : index
    %172 = vector.load %arg5[%c0_118, %c0_119] : memref<8x4xf32, #tpu.memory_space<vmem>>, vector<8x4xf32>
    %cst_120 = arith.constant dense<0.000000e+00> : vector<8x256xf32>
    %173 = tpu.matmul %172, %26, %cst_120 {dimension_numbers = #tpu.dot_dimension_numbers<[1], [0], [0], [1], [0, 0, 1, 1], [], []>} : vector<8x4xf32>, vector<4x256xf32>, vector<8x256xf32> -> vector<8x256xf32>
    %c0_121 = arith.constant 0 : index
    %c0_122 = arith.constant 0 : index
    %174 = memref.load %arg6[%c0_121, %c0_122] : memref<1x1xf32, #tpu.memory_space<smem>>
    %175 = vector.broadcast %174 : f32 to vector<8x256xf32>
    %176 = arith.mulf %173, %175 : vector<8x256xf32>
    %177 = arith.addf %171, %176 : vector<8x256xf32>
    %cst_123 = arith.constant 0.000000e+00 : f32
    %178 = vector.broadcast %cst_123 : f32 to vector<8x256xf32>
    %179 = arith.cmpf oge, %177, %178 : vector<8x256xf32>
    %cst_124 = arith.constant 0.00999999977 : f32
    %180 = vector.broadcast %cst_124 : f32 to vector<8x256xf32>
    %181 = arith.mulf %180, %177 : vector<8x256xf32>
    %182 = arith.select %179, %177, %181 : vector<8x256xi1>, vector<8x256xf32>
    %183 = arith.index_cast %c0_i32_6 : i32 to index
    %c0_125 = arith.constant 0 : index
    %c0_126 = arith.constant 0 : index
    %184 = vector.load %arg7[%183, %c0_125, %c0_126] : memref<1x8x256xf32, #tpu.memory_space<vmem>>, vector<1x8x256xf32>
    %185 = vector.shape_cast %184 : vector<1x8x256xf32> to vector<8x256xf32>
    %186 = vector.shape_cast %182 : vector<8x256xf32> to vector<1x8x256xf32>
    tpu.vector_store %arg7[%183, %c0_125, %c0_126], %186 {strides = array<i32>} : memref<1x8x256xf32, #tpu.memory_space<vmem>>, vector<1x8x256xf32>,
    %c1_i32_127 = arith.constant 1 : i32
    return
  }
  func.func @transform_0(%arg0: i32) -> (i32, i32, i32) {
    %c0_i32 = arith.constant 0 : i32
    %c0_i32_0 = arith.constant 0 : i32
    %c0_i32_1 = arith.constant 0 : i32
    return %arg0, %c0_i32, %c0_i32_0 : i32, i32, i32
  }
  func.func @transform_1(%arg0: i32) -> (i32, i32, i32) {
    %c0_i32 = arith.constant 0 : i32
    %c0_i32_0 = arith.constant 0 : i32
    %c0_i32_1 = arith.constant 0 : i32
    %c0_i32_2 = arith.constant 0 : i32
    return %c0_i32, %c0_i32_0, %c0_i32_1 : i32, i32, i32
  }
  func.func @transform_2(%arg0: i32) -> (i32, i32) {
    %c0_i32 = arith.constant 0 : i32
    %c0_i32_0 = arith.constant 0 : i32
    %c0_i32_1 = arith.constant 0 : i32
    return %c0_i32, %c0_i32_0 : i32, i32
  }
  func.func @transform_3(%arg0: i32) -> (i32, i32, i32) {
    %c0_i32 = arith.constant 0 : i32
    %c0_i32_0 = arith.constant 0 : i32
    %c0_i32_1 = arith.constant 0 : i32
    %c0_i32_2 = arith.constant 0 : i32
    return %c0_i32, %c0_i32_0, %c0_i32_1 : i32, i32, i32
  }
  func.func @transform_4(%arg0: i32) -> (i32, i32) {
    %c0_i32 = arith.constant 0 : i32
    %c0_i32_0 = arith.constant 0 : i32
    %c0_i32_1 = arith.constant 0 : i32
    return %c0_i32, %c0_i32_0 : i32, i32
  }
  func.func @transform_5(%arg0: i32) -> (i32, i32) {
    %c0_i32 = arith.constant 0 : i32
    %c0_i32_0 = arith.constant 0 : i32
    %c0_i32_1 = arith.constant 0 : i32
    return %c0_i32, %c0_i32_0 : i32, i32
  }
  func.func @transform_6(%arg0: i32) -> (i32, i32, i32) {
    %c0_i32 = arith.constant 0 : i32
    %c0_i32_0 = arith.constant 0 : i32
    %c0_i32_1 = arith.constant 0 : i32
    return %arg0, %c0_i32, %c0_i32_0 : i32, i32, i32
  }
}

</mosaic_0001>

<llo_original>
// kernel: tpu_custom_call.1
$region0: #{tpu_custom_call.1}
  #allocation0 [shape = 'u32[]', space=smem, size = 0x4, offset = 0x4, fixed_abs, tag = 'smem constant byte address 0x4 - core index']
  #allocation1 [shape = 'u32[72,128]{1,0:T(1,128)}', space=vmem, size = 0x9000, scoped, tag = 'internal scratch']
  #allocation2 [shape = 'f32[8,401]{1,0:T(8,128)}', space=vmem, size = 0x4000, scoped, tag = 'scratch operand']
  #allocation3 [shape = 'f32[1,1]{1,0:T(1,128)S(6)}', space=smem, size = 0x200, scoped, tag = 'scoped memory for tpu_custom_call.1']
  %s0 = inlined_call_operand.vmem [shape: f32[2,4,256], index: 0, kind: input, shape index: {}]
  %s1 = inlined_call_operand.vmem [shape: f32[9,8,4], index: 1, kind: input, shape index: {}]
  %s2 = inlined_call_operand.vmem [shape: f32[8,1], index: 2, kind: input, shape index: {}]
  %s3 = inlined_call_operand.vmem [shape: f32[9,8,8], index: 3, kind: input, shape index: {}]
  %s4 = inlined_call_operand.vmem [shape: f32[8,4], index: 4, kind: input, shape index: {}]
  %s5 = inlined_call_operand.<no memory space> [shape: f32[1,1], index: 5, kind: input, shape index: {}]
  %s6 = inlined_call_operand.hbm [shape: f32[2,8,256], index: 6, kind: output, shape index: {}]
  %s7 = sld [smem:[#allocation0]]
  $region61: #{tpu_custom_call.1} parent=0
    _
  %s9 = ssub.s32 1, %s7
  %s10 = scalar_select 0, %s9, %s7
  %11 = sst [smem:[#allocation3]] %s5
  $region1: #{tpu_custom_call.1} parent=0
    #allocation4 [shape = 'u8[16384]{0}', space=vmem, size = 0x4000, scoped, tag = 'output window, operand 0']
    #allocation5 [shape = 's32[2]{0}', space=sflag, size = 0x8, scoped, tag = 'scoped memory for tpu_custom_call.1']
    %12 = vsyncpa [#allocation5], 0
    %s13 = scalar_lea.sflag [#allocation5], 1
    %14 = vsyncpa %s13, 0
    loop: start=0, step=1, limit=4
    $region2: #{tpu_custom_call.1} parent=1 // loop_pre_header
      _
    $region3: #{tpu_custom_call.1} parent=1 // loop_header
      %s16 = sphi 0, %s20
      %p17 = scmp.ge.s32.totalorder %s16, 4
      %s26 = sphi 0, %s28
      %s29 = sphi 0, %s26
      %s30 = sphi 0, %s29
      %s46 = sphi 0, %s30
      %s50 = sphi 0, %s50
      %s52 = sphi 0, %s50
      %s53 = sphi 0, %s52
      %s67 = sphi 0, %s53
      %s71 = sphi 0, %s71
      %s73 = sphi 0, %s71
      %s74 = sphi 0, %s73
      %s88 = sphi 0, %s74
      %s92 = sphi 0, %s92
      %s94 = sphi 0, %s92
      %s95 = sphi 0, %s94
      %s109 = sphi 0, %s95
      %s113 = sphi 0, %s113
      %s115 = sphi 0, %s113
      %s116 = sphi 0, %s115
      %s130 = sphi 0, %s116
      %s134 = sphi 0, %s134
      %s136 = sphi 0, %s134
      %s137 = sphi 0, %s136
      %s151 = sphi 0, %s137
      %s157 = sphi 0, %s159
      %s160 = sphi 0, %s157
      %s161 = sphi 0, %s160
      %s177 = sphi 0, %s161
    $region4: #{tpu_custom_call.1} parent=1 // loop_header_branch
      %19 = sbr.rel (%p17) target = $region8
    $region5: #{tpu_custom_call.1} parent=1 // loop_body
      %s21 = ssub.s32 %s16, 1
      %s22 = ssub.s32 %s16, 2
      %s23 = sadd.s32 %s16, 1
      %s24 = ssub.s32 %s16, %s23
      %p25 = scmp.eq.s32.totalorder %s24, 0
      %s27 = sadd.s32 %s26, 1
      %s28 = scalar_select %p25, %s26, %s27
      %p31 = pneg %p25
      %p32 = scmp.eq.s32.totalorder %s16, 1
      %p33 = por %p31, %p32
      %p34 = scmp.ne.s32.totalorder %s26, %s29
      %p35 = scmp.eq.s32.totalorder %s16, 0
      %p36 = por %p34, %p35
      %p37 = scmp.ne.s32.totalorder %s26, %s29
      %p38 = scmp.eq.s32.totalorder %s21, 1
      %p39 = por %p37, %p38
      %p40 = scmp.ne.s32.totalorder %s29, %s30
      %p41 = scmp.eq.s32.totalorder %s21, 0
      %p42 = por %p40, %p41
      %p43 = scmp.ne.s32.totalorder %s29, %s30
      %p44 = scmp.eq.s32.totalorder %s22, 1
      %p45 = por %p43, %p44
      %p47 = scmp.ne.s32.totalorder %s30, %s46
      %p48 = scmp.eq.s32.totalorder %s22, 0
      %p49 = por %p47, %p48
      %s51 = sadd.s32 %s50, 1
      %p54 = scmp.eq.s32.totalorder %s16, 1
      %p55 = scmp.ne.s32.totalorder %s50, %s52
      %p56 = scmp.eq.s32.totalorder %s16, 0
      %p57 = por %p55, %p56
      %p58 = scmp.ne.s32.totalorder %s50, %s52
      %p59 = scmp.eq.s32.totalorder %s21, 1
      %p60 = por %p58, %p59
      %p61 = scmp.ne.s32.totalorder %s52, %s53
      %p62 = scmp.eq.s32.totalorder %s21, 0
      %p63 = por %p61, %p62
      %p64 = scmp.ne.s32.totalorder %s52, %s53
      %p65 = scmp.eq.s32.totalorder %s22, 1
      %p66 = por %p64, %p65
      %p68 = scmp.ne.s32.totalorder %s53, %s67
      %p69 = scmp.eq.s32.totalorder %s22, 0
      %p70 = por %p68, %p69
      %s72 = sadd.s32 %s71, 1
      %p75 = scmp.eq.s32.totalorder %s16, 1
      %p76 = scmp.ne.s32.totalorder %s71, %s73
      %p77 = scmp.eq.s32.totalorder %s16, 0
      %p78 = por %p76, %p77
      %p79 = scmp.ne.s32.totalorder %s71, %s73
      %p80 = scmp.eq.s32.totalorder %s21, 1
      %p81 = por %p79, %p80
      %p82 = scmp.ne.s32.totalorder %s73, %s74
      %p83 = scmp.eq.s32.totalorder %s21, 0
      %p84 = por %p82, %p83
      %p85 = scmp.ne.s32.totalorder %s73, %s74
      %p86 = scmp.eq.s32.totalorder %s22, 1
      %p87 = por %p85, %p86
      %p89 = scmp.ne.s32.totalorder %s74, %s88
      %p90 = scmp.eq.s32.totalorder %s22, 0
      %p91 = por %p89, %p90
      %s93 = sadd.s32 %s92, 1
      %p96 = scmp.eq.s32.totalorder %s16, 1
      %p97 = scmp.ne.s32.totalorder %s92, %s94
      %p98 = scmp.eq.s32.totalorder %s16, 0
      %p99 = por %p97, %p98
      %p100 = scmp.ne.s32.totalorder %s92, %s94
      %p101 = scmp.eq.s32.totalorder %s21, 1
      %p102 = por %p100, %p101
      %p103 = scmp.ne.s32.totalorder %s94, %s95
      %p104 = scmp.eq.s32.totalorder %s21, 0
      %p105 = por %p103, %p104
      %p106 = scmp.ne.s32.totalorder %s94, %s95
      %p107 = scmp.eq.s32.totalorder %s22, 1
      %p108 = por %p106, %p107
      %p110 = scmp.ne.s32.totalorder %s95, %s109
      %p111 = scmp.eq.s32.totalorder %s22, 0
      %p112 = por %p110, %p111
      %s114 = sadd.s32 %s113, 1
      %p117 = scmp.eq.s32.totalorder %s16, 1
      %p118 = scmp.ne.s32.totalorder %s113, %s115
      %p119 = scmp.eq.s32.totalorder %s16, 0
      %p120 = por %p118, %p119
      %p121 = scmp.ne.s32.totalorder %s113, %s115
      %p122 = scmp.eq.s32.totalorder %s21, 1
      %p123 = por %p121, %p122
      %p124 = scmp.ne.s32.totalorder %s115, %s116
      %p125 = scmp.eq.s32.totalorder %s21, 0
      %p126 = por %p124, %p125
      %p127 = scmp.ne.s32.totalorder %s115, %s116
      %p128 = scmp.eq.s32.totalorder %s22, 1
      %p129 = por %p127, %p128
      %p131 = scmp.ne.s32.totalorder %s116, %s130
      %p132 = scmp.eq.s32.totalorder %s22, 0
      %p133 = por %p131, %p132
      %s135 = sadd.s32 %s134, 1
      %p138 = scmp.eq.s32.totalorder %s16, 1
      %p139 = scmp.ne.s32.totalorder %s134, %s136
      %p140 = scmp.eq.s32.totalorder %s16, 0
      %p141 = por %p139, %p140
      %p142 = scmp.ne.s32.totalorder %s134, %s136
      %p143 = scmp.eq.s32.totalorder %s21, 1
      %p144 = por %p142, %p143
      %p145 = scmp.ne.s32.totalorder %s136, %s137
      %p146 = scmp.eq.s32.totalorder %s21, 0
      %p147 = por %p145, %p146
      %p148 = scmp.ne.s32.totalorder %s136, %s137
      %p149 = scmp.eq.s32.totalorder %s22, 1
      %p150 = por %p148, %p149
      %p152 = scmp.ne.s32.totalorder %s137, %s151
      %p153 = scmp.eq.s32.totalorder %s22, 0
      %p154 = por %p152, %p153
      %s155 = ssub.s32 %s16, %s23
      %p156 = scmp.eq.s32.totalorder %s155, 0
      %s158 = sadd.s32 %s157, 1
      %s159 = scalar_select %p156, %s157, %s158
      %p162 = pneg %p156
      %p163 = scmp.eq.s32.totalorder %s16, 1
      %p164 = por %p162, %p163
      %p165 = scmp.ne.s32.totalorder %s157, %s160
      %p166 = scmp.eq.s32.totalorder %s16, 0
      %p167 = por %p165, %p166
      %p168 = scmp.ne.s32.totalorder %s157, %s160
      %p169 = scmp.eq.s32.totalorder %s21, 1
      %p170 = por %p168, %p169
      %p171 = scmp.ne.s32.totalorder %s160, %s161
      %p172 = scmp.eq.s32.totalorder %s21, 0
      %p173 = por %p171, %p172
      %p174 = scmp.ne.s32.totalorder %s160, %s161
      %p175 = scmp.eq.s32.totalorder %s22, 1
      %p176 = por %p174, %p175
      %p178 = scmp.ne.s32.totalorder %s161, %s177
      %p179 = scmp.eq.s32.totalorder %s22, 0
      %p180 = por %p178, %p179
      %p181 = scmp.le.s32.totalorder 1, %s16
      %p182 = scmp.lt.s32.totalorder %s16, 3
      %p183 = pnand %p181, %p182
      %p184 = pneg %p183
      // Predicated region
      $region9: #{tpu_custom_call.1} parent=5 // pred_check
        _
      $region10: #{tpu_custom_call.1} parent=5 // pred_check_branch
        %186 = sbr.rel (%p183) target = $region12
      $region11: #{tpu_custom_call.1} parent=5 // pred_region
        %s187 = ssub.s32 %s16, 1
        // Predicated region
        $region13: #{tpu_custom_call.1} parent=11 // pred_check
          %p188 = pneg %p63
        $region14: #{tpu_custom_call.1} parent=11 // pred_check_branch
          %190 = sbr.rel (%p188) target = $region16
        $region15: #{tpu_custom_call.1} parent=11 // pred_region
          _
        $region16: #{tpu_custom_call.1} parent=11 // pred_fallthru
          _
        // Predicated region
        $region17: #{tpu_custom_call.1} parent=11 // pred_check
          %p191 = pneg %p84
        $region18: #{tpu_custom_call.1} parent=11 // pred_check_branch
          %193 = sbr.rel (%p191) target = $region20
        $region19: #{tpu_custom_call.1} parent=11 // pred_region
          _
        $region20: #{tpu_custom_call.1} parent=11 // pred_fallthru
          _
        // Predicated region
        $region21: #{tpu_custom_call.1} parent=11 // pred_check
          %p194 = pneg %p105
        $region22: #{tpu_custom_call.1} parent=11 // pred_check_branch
          %196 = sbr.rel (%p194) target = $region24
        $region23: #{tpu_custom_call.1} parent=11 // pred_region
          _
        $region24: #{tpu_custom_call.1} parent=11 // pred_fallthru
          _
        // Predicated region
        $region25: #{tpu_custom_call.1} parent=11 // pred_check
          %p197 = pneg %p126
        $region26: #{tpu_custom_call.1} parent=11 // pred_check_branch
          %199 = sbr.rel (%p197) target = $region28
        $region27: #{tpu_custom_call.1} parent=11 // pred_region
          _
        $region28: #{tpu_custom_call.1} parent=11 // pred_fallthru
          _
        // Predicated region
        $region29: #{tpu_custom_call.1} parent=11 // pred_check
          %p200 = pneg %p147
        $region30: #{tpu_custom_call.1} parent=11 // pred_check_branch
          %202 = sbr.rel (%p200) target = $region32
        $region31: #{tpu_custom_call.1} parent=11 // pred_region
          _
        $region32: #{tpu_custom_call.1} parent=11 // pred_fallthru
          _
      $region12: #{tpu_custom_call.1} parent=5 // pred_fallthru
        _
      %p203 = scmp.lt.s32.totalorder %s16, 2
      // Predicated region
      $region33: #{tpu_custom_call.1} parent=5 // pred_check
        %p204 = pneg %p203
      $region34: #{tpu_custom_call.1} parent=5 // pred_check_branch
        %206 = sbr.rel (%p204) target = $region36
      $region35: #{tpu_custom_call.1} parent=5 // pred_region
        // Predicated region
        $region37: #{tpu_custom_call.1} parent=35 // pred_check
          %p207 = pneg %p36
        $region38: #{tpu_custom_call.1} parent=35 // pred_check_branch
          %209 = sbr.rel (%p207) target = $region40
        $region39: #{tpu_custom_call.1} parent=35 // pred_region
          %p210 = scmp.lt.s32.totalorder %s16, 1
          %s211 = scalar_select %p210, %s16, 1
          %s212 = smul.addr %s211, 2
          %s213 = smul.addr %s212, 4
          %s214 = scalar_lea.vmem %s0, %s213
        $region40: #{tpu_custom_call.1} parent=35 // pred_fallthru
          _
      $region36: #{tpu_custom_call.1} parent=5 // pred_fallthru
        _
      %p215 = scmp.le.s32.totalorder 1, %s16
      %p216 = scmp.lt.s32.totalorder %s16, 3
      %p217 = pnand %p215, %p216
      %p218 = pneg %p217
      // Predicated region
      $region41: #{tpu_custom_call.1} parent=5 // pred_check
        _
      $region42: #{tpu_custom_call.1} parent=5 // pred_check_branch
        %220 = sbr.rel (%p217) target = $region44
      $region43: #{tpu_custom_call.1} parent=5 // pred_region
        %s221 = ssub.s32 %s16, 1
        %p222 = scmp.lt.s32.totalorder %s21, 1
        %s223 = scalar_select %p222, %s21, 1
        %s224 = smul.addr %s223, 2
        %s225 = smul.addr %s224, 4
        %s226 = scalar_lea.vmem %s0, %s225
        %p227 = pneg %p42
        %p228 = pneg %p39
        %p229 = pneg %p63
        %p230 = pneg %p60
        %p231 = pneg %p84
        %p232 = pneg %p81
        %p233 = pneg %p105
        %p234 = pneg %p102
        %p235 = pneg %p126
        %p236 = pneg %p123
        %p237 = pneg %p147
        %p238 = pneg %p144
        %p239 = pneg %p173
        %p240 = pneg %p170
        %s241 = sand.u32 %s160, 1
        %s242 = scalar_lea.sflag [#allocation5], %s241
        %s243 = sand.u32 %s160, 1
        %s244 = smul.addr %s243, 16
        %s245 = scalar_lea.vmem [#allocation4], %s244
        %p246 = scmp.lt.s32.totalorder %s21, 1
        %s247 = scalar_select %p246, %s21, 1
        %s248 = smul.addr %s247, 2
        %s249 = smul.addr %s248, 4
        %s250 = scalar_lea.vmem %s0, %s249
        %p251 = scmp.eq.s32.totalorder %s21, 0
        // Predicated region
        $region45: #{tpu_custom_call.1} parent=43 // pred_check
          %p252 = pneg %p251
        $region46: #{tpu_custom_call.1} parent=43 // pred_check_branch
          %254 = sbr.rel (%p252) target = $region48
        $region47: #{tpu_custom_call.1} parent=43 // pred_region
          %255 = vst [vmem:[#allocation2] sm:$0xff] 0.0
          %256 = vst [vmem:[#allocation2 + $0x8] sm:$0xff] 0.0
          %257 = vst [vmem:[#allocation2 + $0x10] sm:$0xff] 0.0
          %vm258 = vcmask 138240
          %259 = vst.msk [vmem:[#allocation2 + $0x18] sm:$0xff] %vm258, 0.0
        $region48: #{tpu_custom_call.1} parent=43 // pred_fallthru
          _
        %v260 = vlaneseq
        %v261 = vand.u32 %v260, 127
        %v262 = vadd.s32 %v261, 128
        %vm263 = vcmp.lt.s32.totalorder %v261, 0
        %v264 = vsub.s32 0, %v261
        %v265 = vsel %vm263, %v264, %v261
        %v266 = vshrl.u32 %v265, 4
        %v267 = vand.u32 %v265, 15
        %v268 = vsub.s32 0, %v267
        %v269 = vsel %vm263, %v268, %v267
        %vm270 = vcmp.lt.s32.totalorder %v262, 0
        %v271 = vsub.s32 0, %v262
        %v272 = vsel %vm270, %v271, %v262
        %v273 = vshrl.u32 %v272, 4
        %v274 = vand.u32 %v272, 15
        %v275 = vsub.s32 0, %v274
        %v276 = vsel %vm270, %v275, %v274
        %vm277 = vcmp.ne.s32.totalorder %v269, 0
        %vm278 = vcmp.ne.s32.totalorder %v276, 0
        %vm279 = vcmp.lt.s32.totalorder %v269, 0
        %vm280 = vcmp.lt.s32.totalorder %v276, 0
        %vm281 = vmand %vm279, %vm277
        %vm282 = vmand %vm280, %vm278
        %v283 = vadd.s32 %v269, 16
        %v284 = vadd.s32 %v276, 16
        %v285 = vsel %vm281, %v283, %v269
        %v286 = vsel %vm282, %v284, %v276
        %vm287 = vcmp.ne.s32.totalorder %v285, 0
        %vm288 = vcmp.ne.s32.totalorder %v286, 0
        %vm289 = vcmp.ne.s32.totalorder %v285, 15
        %vm290 = vcmp.ne.s32.totalorder %v286, 15
        %v291 = vld [vmem:[%s250] sm:$0xff]
        %293 = vst [vmem:[#allocation1] ss:$2 sm:$0xff] %v291
        %v294 = vld.sshfl [vmem:[#allocation1] sm:$0xff pattern:$0x75316420]
        %v295 = vld.sshfl [vmem:[#allocation1 + $0x8] sm:$0xff pattern:$0x75316420]
        %298 = vst [vmem:[#allocation2 + $0x8] sm:$0xf] %v294
        %299 = vst [vmem:[#allocation2 + $0x10] sm:$0xf] %v295
        %v300 = vld [vmem:[#allocation2] sm:$0xf]
        %v301 = vld [vmem:[#allocation2 + $0x8] sm:$0xf]
        %v302 = vld [vmem:[#allocation2 + $0x10] sm:$0xf]
        %v303 = vsel %vm287, 1, 0
        %v304 = vsel %vm288, 1, 0
        %vm305 = vcmp.eq.s32.totalorder %v303, 1
        %vm306 = vcmp.eq.s32.totalorder %v304, 1
        %310 = vrot.lane.b32.xlu0 %v300, 17
        %v311 = vpop.permute.xlu0 %310
        %312 = vrot.lane.b32.xlu0 %v301, 17
        %v313 = vpop.permute.xlu0 %312
        %314 = vrot.lane.b32.xlu0 %v302, 17
        %v315 = vpop.permute.xlu0 %314
        %vm316 = vcmask 138240
        %v317 = vsel %vm316, %v311, %v313
        %v318 = vsel %vm316, %v313, %v315
        %v321 = vsel %vm305, %v317, 0.0
        %v322 = vsel %vm306, %v318, 0.0
        %v323 = vld [vmem:[%s1] sm:$0xff]
        %s324 = scalar_lea.vmem %s1, 8
        %v325 = vld [vmem:[%s324] sm:$0xff]
        %326 = vrot.lane.b32.xlu0 %v300, 16
        %v327 = vpop.permute.xlu0 %326
        %328 = vrot.lane.b32.xlu0 %v301, 16
        %v329 = vpop.permute.xlu0 %328
        %330 = vrot.lane.b32.xlu0 %v302, 16
        %v331 = vpop.permute.xlu0 %330
        %vm332 = vcmask 130048
        %v333 = vsel %vm332, %v327, %v329
        %v334 = vsel %vm332, %v329, %v331
        %vm335 = vcmask 31744
        %v337 = vsel %vm335, %v325, 0
        %vm339 = vcmask 1043456
        %v340 = vsel %vm339, %v333, 0
        %v342 = vsel %vm339, %v334, 0
        %344 = vmatpush.msra.mxu0 0.0
        %345 = vmatpush.msra.mxu0 0.0
        %346 = vmatpush.msra.mxu0 0.0
        %347 = vmatpush.msra.mxu0 0.0
        %348 = vmatpush.msra.mxu0 0.0
        %349 = vmatpush.msra.mxu0 0.0
        %350 = vmatpush.msra.mxu0 0.0
        %351 = vmatpush.msra.mxu0 0.0
        %352 = vmatpush.msra.mxu0 0.0
        %353 = vmatpush.msra.mxu0 0.0
        %354 = vmatpush.msra.mxu0 0.0
        %355 = vmatpush.msra.mxu0 0.0
        %356 = vmatpush.msra.mxu0 0.0
        %357 = vmatpush.msra.mxu0 0.0
        %358 = vmatpush.msra.mxu0 0.0
        %359 = vmatpush.msra.mxu0 %v340
        %360 = vmatmul.f32.gmra.mxu0 %v337
        %v361 = vpop.f32.mrf.mxu0
        %v362 = vadd.f32 0.0, %v361
        %363 = vdwg.mxu0
        %364 = vmatpush.msra.mxu0 0.0
        %365 = vmatpush.msra.mxu0 0.0
        %366 = vmatpush.msra.mxu0 0.0
        %367 = vmatpush.msra.mxu0 0.0
        %368 = vmatpush.msra.mxu0 0.0
        %369 = vmatpush.msra.mxu0 0.0
        %370 = vmatpush.msra.mxu0 0.0
        %371 = vmatpush.msra.mxu0 0.0
        %372 = vmatpush.msra.mxu0 0.0
        %373 = vmatpush.msra.mxu0 0.0
        %374 = vmatpush.msra.mxu0 0.0
        %375 = vmatpush.msra.mxu0 0.0
        %376 = vmatpush.msra.mxu0 0.0
        %377 = vmatpush.msra.mxu0 0.0
        %378 = vmatpush.msra.mxu0 0.0
        %379 = vmatpush.msra.mxu0 %v342
        %380 = vmatmul.f32.gmra.mxu0 %v337
        %v381 = vpop.f32.mrf.mxu0
        %v382 = vadd.f32 0.0, %v381
        %383 = vdwg.mxu0
        %v385 = vsel %vm335, %v323, 0
        %v388 = vsel %vm339, %v321, 0
        %v391 = vsel %vm339, %v322, 0
        %393 = vmatpush.msra.mxu0 0.0
        %394 = vmatpush.msra.mxu0 0.0
        %395 = vmatpush.msra.mxu0 0.0
        %396 = vmatpush.msra.mxu0 0.0
        %397 = vmatpush.msra.mxu0 0.0
        %398 = vmatpush.msra.mxu0 0.0
        %399 = vmatpush.msra.mxu0 0.0
        %400 = vmatpush.msra.mxu0 0.0
        %401 = vmatpush.msra.mxu0 0.0
        %402 = vmatpush.msra.mxu0 0.0
        %403 = vmatpush.msra.mxu0 0.0
        %404 = vmatpush.msra.mxu0 0.0
        %405 = vmatpush.msra.mxu0 0.0
        %406 = vmatpush.msra.mxu0 0.0
        %407 = vmatpush.msra.mxu0 0.0
        %408 = vmatpush.msra.mxu0 %v388
        %409 = vmatmul.f32.gmra.mxu0 %v385
        %v410 = vpop.f32.mrf.mxu0
        %v411 = vadd.f32 %v362, %v410
        %412 = vdwg.mxu0
        %413 = vmatpush.msra.mxu0 0.0
        %414 = vmatpush.msra.mxu0 0.0
        %415 = vmatpush.msra.mxu0 0.0
        %416 = vmatpush.msra.mxu0 0.0
        %417 = vmatpush.msra.mxu0 0.0
        %418 = vmatpush.msra.mxu0 0.0
        %419 = vmatpush.msra.mxu0 0.0
        %420 = vmatpush.msra.mxu0 0.0
        %421 = vmatpush.msra.mxu0 0.0
        %422 = vmatpush.msra.mxu0 0.0
        %423 = vmatpush.msra.mxu0 0.0
        %424 = vmatpush.msra.mxu0 0.0
        %425 = vmatpush.msra.mxu0 0.0
        %426 = vmatpush.msra.mxu0 0.0
        %427 = vmatpush.msra.mxu0 0.0
        %428 = vmatpush.msra.mxu0 %v391
        %429 = vmatmul.f32.gmra.mxu0 %v385
        %v430 = vpop.f32.mrf.mxu0
        %v431 = vadd.f32 %v382, %v430
        %432 = vdwg.mxu0
        %v433 = vsel %vm289, 1, 0
        %v434 = vsel %vm290, 1, 0
        %vm435 = vcmp.eq.s32.totalorder %v433, 1
        %vm436 = vcmp.eq.s32.totalorder %v434, 1
        %437 = vrot.lane.b32.xlu0 %v300, 15
        %v438 = vpop.permute.xlu0 %437
        %439 = vrot.lane.b32.xlu0 %v301, 15
        %v440 = vpop.permute.xlu0 %439
        %441 = vrot.lane.b32.xlu0 %v302, 15
        %v442 = vpop.permute.xlu0 %441
        %vm443 = vcmask 121856
        %v444 = vsel %vm443, %v438, %v440
        %v445 = vsel %vm443, %v440, %v442
        %v448 = vsel %vm435, %v444, 0.0
        %v449 = vsel %vm436, %v445, 0.0
        %s450 = scalar_lea.vmem %s1, 16
        %v451 = vld [vmem:[%s450] sm:$0xff]
        %v453 = vsel %vm335, %v451, 0
        %v456 = vsel %vm339, %v448, 0
        %v459 = vsel %vm339, %v449, 0
        %461 = vmatpush.msra.mxu0 0.0
        %462 = vmatpush.msra.mxu0 0.0
        %463 = vmatpush.msra.mxu0 0.0
        %464 = vmatpush.msra.mxu0 0.0
        %465 = vmatpush.msra.mxu0 0.0
        %466 = vmatpush.msra.mxu0 0.0
        %467 = vmatpush.msra.mxu0 0.0
        %468 = vmatpush.msra.mxu0 0.0
        %469 = vmatpush.msra.mxu0 0.0
        %470 = vmatpush.msra.mxu0 0.0
        %471 = vmatpush.msra.mxu0 0.0
        %472 = vmatpush.msra.mxu0 0.0
        %473 = vmatpush.msra.mxu0 0.0
        %474 = vmatpush.msra.mxu0 0.0
        %475 = vmatpush.msra.mxu0 0.0
        %476 = vmatpush.msra.mxu0 %v456
        %477 = vmatmul.f32.gmra.mxu0 %v453
        %v478 = vpop.f32.mrf.mxu0
        %v479 = vadd.f32 0.0, %v478
        %480 = vdwg.mxu0
        %481 = vmatpush.msra.mxu0 0.0
        %482 = vmatpush.msra.mxu0 0.0
        %483 = vmatpush.msra.mxu0 0.0
        %484 = vmatpush.msra.mxu0 0.0
        %485 = vmatpush.msra.mxu0 0.0
        %486 = vmatpush.msra.mxu0 0.0
        %487 = vmatpush.msra.mxu0 0.0
        %488 = vmatpush.msra.mxu0 0.0
        %489 = vmatpush.msra.mxu0 0.0
        %490 = vmatpush.msra.mxu0 0.0
        %491 = vmatpush.msra.mxu0 0.0
        %492 = vmatpush.msra.mxu0 0.0
        %493 = vmatpush.msra.mxu0 0.0
        %494 = vmatpush.msra.mxu0 0.0
        %495 = vmatpush.msra.mxu0 0.0
        %496 = vmatpush.msra.mxu0 %v459
        %497 = vmatmul.f32.gmra.mxu0 %v453
        %v498 = vpop.f32.mrf.mxu0
        %v499 = vadd.f32 0.0, %v498
        %500 = vdwg.mxu0
        %v501 = vadd.f32 %v411, %v479
        %v502 = vadd.f32 %v431, %v499
        %503 = vrot.lane.b32.xlu0 %v300, 1
        %v504 = vpop.permute.xlu0 %503
        %505 = vrot.lane.b32.xlu0 %v301, 1
        %v506 = vpop.permute.xlu0 %505
        %507 = vrot.lane.b32.xlu0 %v302, 1
        %v508 = vpop.permute.xlu0 %507
        %vm509 = vcmask 7168
        %v510 = vsel %vm509, %v504, %v506
        %v511 = vsel %vm509, %v506, %v508
        %v514 = vsel %vm305, %v510, 0.0
        %v515 = vsel %vm306, %v511, 0.0
        %s516 = scalar_lea.vmem %s1, 24
        %v517 = vld [vmem:[%s516] sm:$0xff]
        %v519 = vsel %vm335, %v517, 0
        %v522 = vsel %vm339, %v514, 0
        %v525 = vsel %vm339, %v515, 0
        %527 = vmatpush.msra.mxu0 0.0
        %528 = vmatpush.msra.mxu0 0.0
        %529 = vmatpush.msra.mxu0 0.0
        %530 = vmatpush.msra.mxu0 0.0
        %531 = vmatpush.msra.mxu0 0.0
        %532 = vmatpush.msra.mxu0 0.0
        %533 = vmatpush.msra.mxu0 0.0
        %534 = vmatpush.msra.mxu0 0.0
        %535 = vmatpush.msra.mxu0 0.0
        %536 = vmatpush.msra.mxu0 0.0
        %537 = vmatpush.msra.mxu0 0.0
        %538 = vmatpush.msra.mxu0 0.0
        %539 = vmatpush.msra.mxu0 0.0
        %540 = vmatpush.msra.mxu0 0.0
        %541 = vmatpush.msra.mxu0 0.0
        %542 = vmatpush.msra.mxu0 %v522
        %543 = vmatmul.f32.gmra.mxu0 %v519
        %v544 = vpop.f32.mrf.mxu0
        %v545 = vadd.f32 0.0, %v544
        %546 = vdwg.mxu0
        %547 = vmatpush.msra.mxu0 0.0
        %548 = vmatpush.msra.mxu0 0.0
        %549 = vmatpush.msra.mxu0 0.0
        %550 = vmatpush.msra.mxu0 0.0
        %551 = vmatpush.msra.mxu0 0.0
        %552 = vmatpush.msra.mxu0 0.0
        %553 = vmatpush.msra.mxu0 0.0
        %554 = vmatpush.msra.mxu0 0.0
        %555 = vmatpush.msra.mxu0 0.0
        %556 = vmatpush.msra.mxu0 0.0
        %557 = vmatpush.msra.mxu0 0.0
        %558 = vmatpush.msra.mxu0 0.0
        %559 = vmatpush.msra.mxu0 0.0
        %560 = vmatpush.msra.mxu0 0.0
        %561 = vmatpush.msra.mxu0 0.0
        %562 = vmatpush.msra.mxu0 %v525
        %563 = vmatmul.f32.gmra.mxu0 %v519
        %v564 = vpop.f32.mrf.mxu0
        %v565 = vadd.f32 0.0, %v564
        %566 = vdwg.mxu0
        %v567 = vadd.f32 %v501, %v545
        %v568 = vadd.f32 %v502, %v565
        %s569 = scalar_lea.vmem %s1, 32
        %v570 = vld [vmem:[%s569] sm:$0xff]
        %v572 = vsel %vm335, %v570, 0
        %v574 = vsel %vm339, %v301, 0
        %v576 = vsel %vm339, %v302, 0
        %578 = vmatpush.msra.mxu0 0.0
        %579 = vmatpush.msra.mxu0 0.0
        %580 = vmatpush.msra.mxu0 0.0
        %581 = vmatpush.msra.mxu0 0.0
        %582 = vmatpush.msra.mxu0 0.0
        %583 = vmatpush.msra.mxu0 0.0
        %584 = vmatpush.msra.mxu0 0.0
        %585 = vmatpush.msra.mxu0 0.0
        %586 = vmatpush.msra.mxu0 0.0
        %587 = vmatpush.msra.mxu0 0.0
        %588 = vmatpush.msra.mxu0 0.0
        %589 = vmatpush.msra.mxu0 0.0
        %590 = vmatpush.msra.mxu0 0.0
        %591 = vmatpush.msra.mxu0 0.0
        %592 = vmatpush.msra.mxu0 0.0
        %593 = vmatpush.msra.mxu0 %v574
        %594 = vmatmul.f32.gmra.mxu0 %v572
        %v595 = vpop.f32.mrf.mxu0
        %v596 = vadd.f32 0.0, %v595
        %597 = vdwg.mxu0
        %598 = vmatpush.msra.mxu0 0.0
        %599 = vmatpush.msra.mxu0 0.0
        %600 = vmatpush.msra.mxu0 0.0
        %601 = vmatpush.msra.mxu0 0.0
        %602 = vmatpush.msra.mxu0 0.0
        %603 = vmatpush.msra.mxu0 0.0
        %604 = vmatpush.msra.mxu0 0.0
        %605 = vmatpush.msra.mxu0 0.0
        %606 = vmatpush.msra.mxu0 0.0
        %607 = vmatpush.msra.mxu0 0.0
        %608 = vmatpush.msra.mxu0 0.0
        %609 = vmatpush.msra.mxu0 0.0
        %610 = vmatpush.msra.mxu0 0.0
        %611 = vmatpush.msra.mxu0 0.0
        %612 = vmatpush.msra.mxu0 0.0
        %613 = vmatpush.msra.mxu0 %v576
        %614 = vmatmul.f32.gmra.mxu0 %v572
        %v615 = vpop.f32.mrf.mxu0
        %v616 = vadd.f32 0.0, %v615
        %617 = vdwg.mxu0
        %v618 = vadd.f32 %v567, %v596
        %v619 = vadd.f32 %v568, %v616
        %v620 = vld [vmem:[#allocation2 + $0x8] sm:$0xf]
        %v621 = vld [vmem:[#allocation2 + $0x10] sm:$0xf]
        %v622 = vld [vmem:[#allocation2 + $0x18] sm:$0xf]
        %626 = vrot.lane.b32.xlu0 %v620, 127
        %v627 = vpop.permute.xlu0 %626
        %628 = vrot.lane.b32.xlu0 %v621, 127
        %v629 = vpop.permute.xlu0 %628
        %630 = vrot.lane.b32.xlu0 %v622, 127
        %v631 = vpop.permute.xlu0 %630
        %vm632 = vcmask 1039360
        %v633 = vsel %vm632, %v627, %v629
        %v634 = vsel %vm632, %v629, %v631
        %v637 = vsel %vm435, %v633, 0.0
        %v638 = vsel %vm436, %v634, 0.0
        %s639 = scalar_lea.vmem %s1, 40
        %v640 = vld [vmem:[%s639] sm:$0xff]
        %v642 = vsel %vm335, %v640, 0
        %v645 = vsel %vm339, %v637, 0
        %v648 = vsel %vm339, %v638, 0
        %650 = vmatpush.msra.mxu0 0.0
        %651 = vmatpush.msra.mxu0 0.0
        %652 = vmatpush.msra.mxu0 0.0
        %653 = vmatpush.msra.mxu0 0.0
        %654 = vmatpush.msra.mxu0 0.0
        %655 = vmatpush.msra.mxu0 0.0
        %656 = vmatpush.msra.mxu0 0.0
        %657 = vmatpush.msra.mxu0 0.0
        %658 = vmatpush.msra.mxu0 0.0
        %659 = vmatpush.msra.mxu0 0.0
        %660 = vmatpush.msra.mxu0 0.0
        %661 = vmatpush.msra.mxu0 0.0
        %662 = vmatpush.msra.mxu0 0.0
        %663 = vmatpush.msra.mxu0 0.0
        %664 = vmatpush.msra.mxu0 0.0
        %665 = vmatpush.msra.mxu0 %v645
        %666 = vmatmul.f32.gmra.mxu0 %v642
        %v667 = vpop.f32.mrf.mxu0
        %v668 = vadd.f32 0.0, %v667
        %669 = vdwg.mxu0
        %670 = vmatpush.msra.mxu0 0.0
        %671 = vmatpush.msra.mxu0 0.0
        %672 = vmatpush.msra.mxu0 0.0
        %673 = vmatpush.msra.mxu0 0.0
        %674 = vmatpush.msra.mxu0 0.0
        %675 = vmatpush.msra.mxu0 0.0
        %676 = vmatpush.msra.mxu0 0.0
        %677 = vmatpush.msra.mxu0 0.0
        %678 = vmatpush.msra.mxu0 0.0
        %679 = vmatpush.msra.mxu0 0.0
        %680 = vmatpush.msra.mxu0 0.0
        %681 = vmatpush.msra.mxu0 0.0
        %682 = vmatpush.msra.mxu0 0.0
        %683 = vmatpush.msra.mxu0 0.0
        %684 = vmatpush.msra.mxu0 0.0
        %685 = vmatpush.msra.mxu0 %v648
        %686 = vmatmul.f32.gmra.mxu0 %v642
        %v687 = vpop.f32.mrf.mxu0
        %v688 = vadd.f32 0.0, %v687
        %689 = vdwg.mxu0
        %v690 = vadd.f32 %v618, %v668
        %v691 = vadd.f32 %v619, %v688
        %692 = vrot.lane.b32.xlu0 %v620, 113
        %v693 = vpop.permute.xlu0 %692
        %694 = vrot.lane.b32.xlu0 %v621, 113
        %v695 = vpop.permute.xlu0 %694
        %696 = vrot.lane.b32.xlu0 %v622, 113
        %v697 = vpop.permute.xlu0 %696
        %vm698 = vcmask 924672
        %v699 = vsel %vm698, %v693, %v695
        %v700 = vsel %vm698, %v695, %v697
        %v703 = vsel %vm305, %v699, 0.0
        %v704 = vsel %vm306, %v700, 0.0
        %s705 = scalar_lea.vmem %s1, 48
        %v706 = vld [vmem:[%s705] sm:$0xff]
        %v708 = vsel %vm335, %v706, 0
        %v711 = vsel %vm339, %v703, 0
        %v714 = vsel %vm339, %v704, 0
        %716 = vmatpush.msra.mxu0 0.0
        %717 = vmatpush.msra.mxu0 0.0
        %718 = vmatpush.msra.mxu0 0.0
        %719 = vmatpush.msra.mxu0 0.0
        %720 = vmatpush.msra.mxu0 0.0
        %721 = vmatpush.msra.mxu0 0.0
        %722 = vmatpush.msra.mxu0 0.0
        %723 = vmatpush.msra.mxu0 0.0
        %724 = vmatpush.msra.mxu0 0.0
        %725 = vmatpush.msra.mxu0 0.0
        %726 = vmatpush.msra.mxu0 0.0
        %727 = vmatpush.msra.mxu0 0.0
        %728 = vmatpush.msra.mxu0 0.0
        %729 = vmatpush.msra.mxu0 0.0
        %730 = vmatpush.msra.mxu0 0.0
        %731 = vmatpush.msra.mxu0 %v711
        %732 = vmatmul.f32.gmra.mxu0 %v708
        %v733 = vpop.f32.mrf.mxu0
        %v734 = vadd.f32 0.0, %v733
        %735 = vdwg.mxu0
        %736 = vmatpush.msra.mxu0 0.0
        %737 = vmatpush.msra.mxu0 0.0
        %738 = vmatpush.msra.mxu0 0.0
        %739 = vmatpush.msra.mxu0 0.0
        %740 = vmatpush.msra.mxu0 0.0
        %741 = vmatpush.msra.mxu0 0.0
        %742 = vmatpush.msra.mxu0 0.0
        %743 = vmatpush.msra.mxu0 0.0
        %744 = vmatpush.msra.mxu0 0.0
        %745 = vmatpush.msra.mxu0 0.0
        %746 = vmatpush.msra.mxu0 0.0
        %747 = vmatpush.msra.mxu0 0.0
        %748 = vmatpush.msra.mxu0 0.0
        %749 = vmatpush.msra.mxu0 0.0
        %750 = vmatpush.msra.mxu0 0.0
        %751 = vmatpush.msra.mxu0 %v714
        %752 = vmatmul.f32.gmra.mxu0 %v708
        %v753 = vpop.f32.mrf.mxu0
        %v754 = vadd.f32 0.0, %v753
        %755 = vdwg.mxu0
        %v756 = vadd.f32 %v690, %v734
        %v757 = vadd.f32 %v691, %v754
        %s758 = scalar_lea.vmem %s1, 56
        %v759 = vld [vmem:[%s758] sm:$0xff]
        %760 = vrot.lane.b32.xlu0 %v620, 112
        %v761 = vpop.permute.xlu0 %760
        %762 = vrot.lane.b32.xlu0 %v621, 112
        %v763 = vpop.permute.xlu0 %762
        %764 = vrot.lane.b32.xlu0 %v622, 112
        %v765 = vpop.permute.xlu0 %764
        %vm766 = vcmask 916480
        %v767 = vsel %vm766, %v761, %v763
        %v768 = vsel %vm766, %v763, %v765
        %v770 = vsel %vm335, %v759, 0
        %v772 = vsel %vm339, %v767, 0
        %v774 = vsel %vm339, %v768, 0
        %776 = vmatpush.msra.mxu0 0.0
        %777 = vmatpush.msra.mxu0 0.0
        %778 = vmatpush.msra.mxu0 0.0
        %779 = vmatpush.msra.mxu0 0.0
        %780 = vmatpush.msra.mxu0 0.0
        %781 = vmatpush.msra.mxu0 0.0
        %782 = vmatpush.msra.mxu0 0.0
        %783 = vmatpush.msra.mxu0 0.0
        %784 = vmatpush.msra.mxu0 0.0
        %785 = vmatpush.msra.mxu0 0.0
        %786 = vmatpush.msra.mxu0 0.0
        %787 = vmatpush.msra.mxu0 0.0
        %788 = vmatpush.msra.mxu0 0.0
        %789 = vmatpush.msra.mxu0 0.0
        %790 = vmatpush.msra.mxu0 0.0
        %791 = vmatpush.msra.mxu0 %v772
        %792 = vmatmul.f32.gmra.mxu0 %v770
        %v793 = vpop.f32.mrf.mxu0
        %v794 = vadd.f32 0.0, %v793
        %795 = vdwg.mxu0
        %796 = vmatpush.msra.mxu0 0.0
        %797 = vmatpush.msra.mxu0 0.0
        %798 = vmatpush.msra.mxu0 0.0
        %799 = vmatpush.msra.mxu0 0.0
        %800 = vmatpush.msra.mxu0 0.0
        %801 = vmatpush.msra.mxu0 0.0
        %802 = vmatpush.msra.mxu0 0.0
        %803 = vmatpush.msra.mxu0 0.0
        %804 = vmatpush.msra.mxu0 0.0
        %805 = vmatpush.msra.mxu0 0.0
        %806 = vmatpush.msra.mxu0 0.0
        %807 = vmatpush.msra.mxu0 0.0
        %808 = vmatpush.msra.mxu0 0.0
        %809 = vmatpush.msra.mxu0 0.0
        %810 = vmatpush.msra.mxu0 0.0
        %811 = vmatpush.msra.mxu0 %v774
        %812 = vmatmul.f32.gmra.mxu0 %v770
        %v813 = vpop.f32.mrf.mxu0
        %v814 = vadd.f32 0.0, %v813
        %815 = vdwg.mxu0
        %v816 = vadd.f32 %v756, %v794
        %v817 = vadd.f32 %v757, %v814
        %818 = vrot.lane.b32.xlu0 %v620, 111
        %v819 = vpop.permute.xlu0 %818
        %820 = vrot.lane.b32.xlu0 %v621, 111
        %v821 = vpop.permute.xlu0 %820
        %822 = vrot.lane.b32.xlu0 %v622, 111
        %v823 = vpop.permute.xlu0 %822
        %vm824 = vcmask 908288
        %v825 = vsel %vm824, %v819, %v821
        %v826 = vsel %vm824, %v821, %v823
        %v829 = vsel %vm435, %v825, 0.0
        %v830 = vsel %vm436, %v826, 0.0
        %s831 = scalar_lea.vmem %s1, 64
        %v832 = vld [vmem:[%s831] sm:$0xff]
        %v834 = vsel %vm335, %v832, 0
        %v837 = vsel %vm339, %v829, 0
        %v840 = vsel %vm339, %v830, 0
        %842 = vmatpush.msra.mxu0 0.0
        %843 = vmatpush.msra.mxu0 0.0
        %844 = vmatpush.msra.mxu0 0.0
        %845 = vmatpush.msra.mxu0 0.0
        %846 = vmatpush.msra.mxu0 0.0
        %847 = vmatpush.msra.mxu0 0.0
        %848 = vmatpush.msra.mxu0 0.0
        %849 = vmatpush.msra.mxu0 0.0
        %850 = vmatpush.msra.mxu0 0.0
        %851 = vmatpush.msra.mxu0 0.0
        %852 = vmatpush.msra.mxu0 0.0
        %853 = vmatpush.msra.mxu0 0.0
        %854 = vmatpush.msra.mxu0 0.0
        %855 = vmatpush.msra.mxu0 0.0
        %856 = vmatpush.msra.mxu0 0.0
        %857 = vmatpush.msra.mxu0 %v837
        %858 = vmatmul.f32.gmra.mxu0 %v834
        %v859 = vpop.f32.mrf.mxu0
        %v860 = vadd.f32 0.0, %v859
        %861 = vdwg.mxu0
        %862 = vmatpush.msra.mxu0 0.0
        %863 = vmatpush.msra.mxu0 0.0
        %864 = vmatpush.msra.mxu0 0.0
        %865 = vmatpush.msra.mxu0 0.0
        %866 = vmatpush.msra.mxu0 0.0
        %867 = vmatpush.msra.mxu0 0.0
        %868 = vmatpush.msra.mxu0 0.0
        %869 = vmatpush.msra.mxu0 0.0
        %870 = vmatpush.msra.mxu0 0.0
        %871 = vmatpush.msra.mxu0 0.0
        %872 = vmatpush.msra.mxu0 0.0
        %873 = vmatpush.msra.mxu0 0.0
        %874 = vmatpush.msra.mxu0 0.0
        %875 = vmatpush.msra.mxu0 0.0
        %876 = vmatpush.msra.mxu0 0.0
        %877 = vmatpush.msra.mxu0 %v840
        %878 = vmatmul.f32.gmra.mxu0 %v834
        %v879 = vpop.f32.mrf.mxu0
        %v880 = vadd.f32 0.0, %v879
        %881 = vdwg.mxu0
        %v882 = vadd.f32 %v816, %v860
        %v883 = vadd.f32 %v817, %v880
        %v884 = vld [vmem:[%s2] sm:$0xff]
        %886 = vset.pattern.permute.xlu0 0
        %887 = vperm.xlu0 %886, %v884
        %v888 = vpop.permute.xlu0 %887
        %v890 = vadd.f32 %v882, %v888
        %v891 = vadd.f32 %v883, %v888
        %v892 = vmax.f32 %v890, 0.0
        %v893 = vmax.f32 %v891, 0.0
        %894 = vst [vmem:[#allocation2 + $0x8] sm:$0xff] %v892
        %895 = vst [vmem:[#allocation2 + $0x10] sm:$0xff] %v893
        %v896 = vld [vmem:[#allocation2] sm:$0xff]
        %v897 = vld [vmem:[#allocation2 + $0x8] sm:$0xff]
        %v898 = vld [vmem:[#allocation2 + $0x10] sm:$0xff]
        %902 = vrot.lane.b32.xlu0 %v896, 17
        %v903 = vpop.permute.xlu0 %902
        %904 = vrot.lane.b32.xlu0 %v897, 17
        %v905 = vpop.permute.xlu0 %904
        %906 = vrot.lane.b32.xlu0 %v898, 17
        %v907 = vpop.permute.xlu0 %906
        %v908 = vsel %vm316, %v903, %v905
        %v909 = vsel %vm316, %v905, %v907
        %v912 = vsel %vm305, %v908, 0.0
        %v913 = vsel %vm306, %v909, 0.0
        %v914 = vld [vmem:[%s3] sm:$0xff]
        %s915 = scalar_lea.vmem %s3, 8
        %v916 = vld [vmem:[%s915] sm:$0xff]
        %917 = vrot.lane.b32.xlu0 %v896, 16
        %v918 = vpop.permute.xlu0 %917
        %919 = vrot.lane.b32.xlu0 %v897, 16
        %v920 = vpop.permute.xlu0 %919
        %921 = vrot.lane.b32.xlu0 %v898, 16
        %v922 = vpop.permute.xlu0 %921
        %v923 = vsel %vm332, %v918, %v920
        %v924 = vsel %vm332, %v920, %v922
        %vm927 = vcmask 64512
        %v929 = vsel %vm927, %v916, 0
        %931 = vmatpush.msra.mxu0 0.0
        %932 = vmatpush.msra.mxu0 0.0
        %933 = vmatpush.msra.mxu0 0.0
        %934 = vmatpush.msra.mxu0 0.0
        %935 = vmatpush.msra.mxu0 0.0
        %936 = vmatpush.msra.mxu0 0.0
        %937 = vmatpush.msra.mxu0 0.0
        %938 = vmatpush.msra.mxu0 0.0
        %939 = vmatpush.msra.mxu0 0.0
        %940 = vmatpush.msra.mxu0 0.0
        %941 = vmatpush.msra.mxu0 0.0
        %942 = vmatpush.msra.mxu0 0.0
        %943 = vmatpush.msra.mxu0 0.0
        %944 = vmatpush.msra.mxu0 0.0
        %945 = vmatpush.msra.mxu0 0.0
        %946 = vmatpush.msra.mxu0 %v923
        %947 = vmatmul.f32.gmra.mxu0 %v929
        %v948 = vpop.f32.mrf.mxu0
        %v949 = vadd.f32 0.0, %v948
        %950 = vdwg.mxu0
        %951 = vmatpush.msra.mxu0 0.0
        %952 = vmatpush.msra.mxu0 0.0
        %953 = vmatpush.msra.mxu0 0.0
        %954 = vmatpush.msra.mxu0 0.0
        %955 = vmatpush.msra.mxu0 0.0
        %956 = vmatpush.msra.mxu0 0.0
        %957 = vmatpush.msra.mxu0 0.0
        %958 = vmatpush.msra.mxu0 0.0
        %959 = vmatpush.msra.mxu0 0.0
        %960 = vmatpush.msra.mxu0 0.0
        %961 = vmatpush.msra.mxu0 0.0
        %962 = vmatpush.msra.mxu0 0.0
        %963 = vmatpush.msra.mxu0 0.0
        %964 = vmatpush.msra.mxu0 0.0
        %965 = vmatpush.msra.mxu0 0.0
        %966 = vmatpush.msra.mxu0 %v924
        %967 = vmatmul.f32.gmra.mxu0 %v929
        %v968 = vpop.f32.mrf.mxu0
        %v969 = vadd.f32 0.0, %v968
        %970 = vdwg.mxu0
        %v972 = vsel %vm927, %v914, 0
        %974 = vmatpush.msra.mxu0 0.0
        %975 = vmatpush.msra.mxu0 0.0
        %976 = vmatpush.msra.mxu0 0.0
        %977 = vmatpush.msra.mxu0 0.0
        %978 = vmatpush.msra.mxu0 0.0
        %979 = vmatpush.msra.mxu0 0.0
        %980 = vmatpush.msra.mxu0 0.0
        %981 = vmatpush.msra.mxu0 0.0
        %982 = vmatpush.msra.mxu0 0.0
        %983 = vmatpush.msra.mxu0 0.0
        %984 = vmatpush.msra.mxu0 0.0
        %985 = vmatpush.msra.mxu0 0.0
        %986 = vmatpush.msra.mxu0 0.0
        %987 = vmatpush.msra.mxu0 0.0
        %988 = vmatpush.msra.mxu0 0.0
        %989 = vmatpush.msra.mxu0 %v912
        %990 = vmatmul.f32.gmra.mxu0 %v972
        %v991 = vpop.f32.mrf.mxu0
        %v992 = vadd.f32 %v949, %v991
        %993 = vdwg.mxu0
        %994 = vmatpush.msra.mxu0 0.0
        %995 = vmatpush.msra.mxu0 0.0
        %996 = vmatpush.msra.mxu0 0.0
        %997 = vmatpush.msra.mxu0 0.0
        %998 = vmatpush.msra.mxu0 0.0
        %999 = vmatpush.msra.mxu0 0.0
        %1000 = vmatpush.msra.mxu0 0.0
        %1001 = vmatpush.msra.mxu0 0.0
        %1002 = vmatpush.msra.mxu0 0.0
        %1003 = vmatpush.msra.mxu0 0.0
        %1004 = vmatpush.msra.mxu0 0.0
        %1005 = vmatpush.msra.mxu0 0.0
        %1006 = vmatpush.msra.mxu0 0.0
        %1007 = vmatpush.msra.mxu0 0.0
        %1008 = vmatpush.msra.mxu0 0.0
        %1009 = vmatpush.msra.mxu0 %v913
        %1010 = vmatmul.f32.gmra.mxu0 %v972
        %v1011 = vpop.f32.mrf.mxu0
        %v1012 = vadd.f32 %v969, %v1011
        %1013 = vdwg.mxu0
        %1014 = vrot.lane.b32.xlu0 %v896, 15
        %v1015 = vpop.permute.xlu0 %1014
        %1016 = vrot.lane.b32.xlu0 %v897, 15
        %v1017 = vpop.permute.xlu0 %1016
        %1018 = vrot.lane.b32.xlu0 %v898, 15
        %v1019 = vpop.permute.xlu0 %1018
        %v1020 = vsel %vm443, %v1015, %v1017
        %v1021 = vsel %vm443, %v1017, %v1019
        %v1024 = vsel %vm435, %v1020, 0.0
        %v1025 = vsel %vm436, %v1021, 0.0
        %s1026 = scalar_lea.vmem %s3, 16
        %v1027 = vld [vmem:[%s1026] sm:$0xff]
        %v1029 = vsel %vm927, %v1027, 0
        %1031 = vmatpush.msra.mxu0 0.0
        %1032 = vmatpush.msra.mxu0 0.0
        %1033 = vmatpush.msra.mxu0 0.0
        %1034 = vmatpush.msra.mxu0 0.0
        %1035 = vmatpush.msra.mxu0 0.0
        %1036 = vmatpush.msra.mxu0 0.0
        %1037 = vmatpush.msra.mxu0 0.0
        %1038 = vmatpush.msra.mxu0 0.0
        %1039 = vmatpush.msra.mxu0 0.0
        %1040 = vmatpush.msra.mxu0 0.0
        %1041 = vmatpush.msra.mxu0 0.0
        %1042 = vmatpush.msra.mxu0 0.0
        %1043 = vmatpush.msra.mxu0 0.0
        %1044 = vmatpush.msra.mxu0 0.0
        %1045 = vmatpush.msra.mxu0 0.0
        %1046 = vmatpush.msra.mxu0 %v1024
        %1047 = vmatmul.f32.gmra.mxu0 %v1029
        %v1048 = vpop.f32.mrf.mxu0
        %v1049 = vadd.f32 0.0, %v1048
        %1050 = vdwg.mxu0
        %1051 = vmatpush.msra.mxu0 0.0
        %1052 = vmatpush.msra.mxu0 0.0
        %1053 = vmatpush.msra.mxu0 0.0
        %1054 = vmatpush.msra.mxu0 0.0
        %1055 = vmatpush.msra.mxu0 0.0
        %1056 = vmatpush.msra.mxu0 0.0
        %1057 = vmatpush.msra.mxu0 0.0
        %1058 = vmatpush.msra.mxu0 0.0
        %1059 = vmatpush.msra.mxu0 0.0
        %1060 = vmatpush.msra.mxu0 0.0
        %1061 = vmatpush.msra.mxu0 0.0
        %1062 = vmatpush.msra.mxu0 0.0
        %1063 = vmatpush.msra.mxu0 0.0
        %1064 = vmatpush.msra.mxu0 0.0
        %1065 = vmatpush.msra.mxu0 0.0
        %1066 = vmatpush.msra.mxu0 %v1025
        %1067 = vmatmul.f32.gmra.mxu0 %v1029
        %v1068 = vpop.f32.mrf.mxu0
        %v1069 = vadd.f32 0.0, %v1068
        %1070 = vdwg.mxu0
        %v1071 = vadd.f32 %v992, %v1049
        %v1072 = vadd.f32 %v1012, %v1069
        %1073 = vrot.lane.b32.xlu0 %v896, 1
        %v1074 = vpop.permute.xlu0 %1073
        %1075 = vrot.lane.b32.xlu0 %v897, 1
        %v1076 = vpop.permute.xlu0 %1075
        %1077 = vrot.lane.b32.xlu0 %v898, 1
        %v1078 = vpop.permute.xlu0 %1077
        %v1079 = vsel %vm509, %v1074, %v1076
        %v1080 = vsel %vm509, %v1076, %v1078
        %v1083 = vsel %vm305, %v1079, 0.0
        %v1084 = vsel %vm306, %v1080, 0.0
        %s1085 = scalar_lea.vmem %s3, 24
        %v1086 = vld [vmem:[%s1085] sm:$0xff]
        %v1088 = vsel %vm927, %v1086, 0
        %1090 = vmatpush.msra.mxu0 0.0
        %1091 = vmatpush.msra.mxu0 0.0
        %1092 = vmatpush.msra.mxu0 0.0
        %1093 = vmatpush.msra.mxu0 0.0
        %1094 = vmatpush.msra.mxu0 0.0
        %1095 = vmatpush.msra.mxu0 0.0
        %1096 = vmatpush.msra.mxu0 0.0
        %1097 = vmatpush.msra.mxu0 0.0
        %1098 = vmatpush.msra.mxu0 0.0
        %1099 = vmatpush.msra.mxu0 0.0
        %1100 = vmatpush.msra.mxu0 0.0
        %1101 = vmatpush.msra.mxu0 0.0
        %1102 = vmatpush.msra.mxu0 0.0
        %1103 = vmatpush.msra.mxu0 0.0
        %1104 = vmatpush.msra.mxu0 0.0
        %1105 = vmatpush.msra.mxu0 %v1083
        %1106 = vmatmul.f32.gmra.mxu0 %v1088
        %v1107 = vpop.f32.mrf.mxu0
        %v1108 = vadd.f32 0.0, %v1107
        %1109 = vdwg.mxu0
        %1110 = vmatpush.msra.mxu0 0.0
        %1111 = vmatpush.msra.mxu0 0.0
        %1112 = vmatpush.msra.mxu0 0.0
        %1113 = vmatpush.msra.mxu0 0.0
        %1114 = vmatpush.msra.mxu0 0.0
        %1115 = vmatpush.msra.mxu0 0.0
        %1116 = vmatpush.msra.mxu0 0.0
        %1117 = vmatpush.msra.mxu0 0.0
        %1118 = vmatpush.msra.mxu0 0.0
        %1119 = vmatpush.msra.mxu0 0.0
        %1120 = vmatpush.msra.mxu0 0.0
        %1121 = vmatpush.msra.mxu0 0.0
        %1122 = vmatpush.msra.mxu0 0.0
        %1123 = vmatpush.msra.mxu0 0.0
        %1124 = vmatpush.msra.mxu0 0.0
        %1125 = vmatpush.msra.mxu0 %v1084
        %1126 = vmatmul.f32.gmra.mxu0 %v1088
        %v1127 = vpop.f32.mrf.mxu0
        %v1128 = vadd.f32 0.0, %v1127
        %1129 = vdwg.mxu0
        %v1130 = vadd.f32 %v1071, %v1108
        %v1131 = vadd.f32 %v1072, %v1128
        %s1132 = scalar_lea.vmem %s3, 32
        %v1133 = vld [vmem:[%s1132] sm:$0xff]
        %v1135 = vsel %vm927, %v1133, 0
        %1137 = vmatpush.msra.mxu0 0.0
        %1138 = vmatpush.msra.mxu0 0.0
        %1139 = vmatpush.msra.mxu0 0.0
        %1140 = vmatpush.msra.mxu0 0.0
        %1141 = vmatpush.msra.mxu0 0.0
        %1142 = vmatpush.msra.mxu0 0.0
        %1143 = vmatpush.msra.mxu0 0.0
        %1144 = vmatpush.msra.mxu0 0.0
        %1145 = vmatpush.msra.mxu0 0.0
        %1146 = vmatpush.msra.mxu0 0.0
        %1147 = vmatpush.msra.mxu0 0.0
        %1148 = vmatpush.msra.mxu0 0.0
        %1149 = vmatpush.msra.mxu0 0.0
        %1150 = vmatpush.msra.mxu0 0.0
        %1151 = vmatpush.msra.mxu0 0.0
        %1152 = vmatpush.msra.mxu0 %v897
        %1153 = vmatmul.f32.gmra.mxu0 %v1135
        %v1154 = vpop.f32.mrf.mxu0
        %v1155 = vadd.f32 0.0, %v1154
        %1156 = vdwg.mxu0
        %1157 = vmatpush.msra.mxu0 0.0
        %1158 = vmatpush.msra.mxu0 0.0
        %1159 = vmatpush.msra.mxu0 0.0
        %1160 = vmatpush.msra.mxu0 0.0
        %1161 = vmatpush.msra.mxu0 0.0
        %1162 = vmatpush.msra.mxu0 0.0
        %1163 = vmatpush.msra.mxu0 0.0
        %1164 = vmatpush.msra.mxu0 0.0
        %1165 = vmatpush.msra.mxu0 0.0
        %1166 = vmatpush.msra.mxu0 0.0
        %1167 = vmatpush.msra.mxu0 0.0
        %1168 = vmatpush.msra.mxu0 0.0
        %1169 = vmatpush.msra.mxu0 0.0
        %1170 = vmatpush.msra.mxu0 0.0
        %1171 = vmatpush.msra.mxu0 0.0
        %1172 = vmatpush.msra.mxu0 %v898
        %1173 = vmatmul.f32.gmra.mxu0 %v1135
        %v1174 = vpop.f32.mrf.mxu0
        %v1175 = vadd.f32 0.0, %v1174
        %1176 = vdwg.mxu0
        %v1177 = vadd.f32 %v1130, %v1155
        %v1178 = vadd.f32 %v1131, %v1175
        %v1179 = vld [vmem:[#allocation2 + $0x8] sm:$0xff]
        %v1180 = vld [vmem:[#allocation2 + $0x10] sm:$0xff]
        %v1181 = vld [vmem:[#allocation2 + $0x18] sm:$0xff]
        %1185 = vrot.lane.b32.xlu0 %v1179, 127
        %v1186 = vpop.permute.xlu0 %1185
        %1187 = vrot.lane.b32.xlu0 %v1180, 127
        %v1188 = vpop.permute.xlu0 %1187
        %1189 = vrot.lane.b32.xlu0 %v1181, 127
        %v1190 = vpop.permute.xlu0 %1189
        %v1191 = vsel %vm632, %v1186, %v1188
        %v1192 = vsel %vm632, %v1188, %v1190
        %v1195 = vsel %vm435, %v1191, 0.0
        %v1196 = vsel %vm436, %v1192, 0.0
        %s1197 = scalar_lea.vmem %s3, 40
        %v1198 = vld [vmem:[%s1197] sm:$0xff]
        %v1200 = vsel %vm927, %v1198, 0
        %1202 = vmatpush.msra.mxu0 0.0
        %1203 = vmatpush.msra.mxu0 0.0
        %1204 = vmatpush.msra.mxu0 0.0
        %1205 = vmatpush.msra.mxu0 0.0
        %1206 = vmatpush.msra.mxu0 0.0
        %1207 = vmatpush.msra.mxu0 0.0
        %1208 = vmatpush.msra.mxu0 0.0
        %1209 = vmatpush.msra.mxu0 0.0
        %1210 = vmatpush.msra.mxu0 0.0
        %1211 = vmatpush.msra.mxu0 0.0
        %1212 = vmatpush.msra.mxu0 0.0
        %1213 = vmatpush.msra.mxu0 0.0
        %1214 = vmatpush.msra.mxu0 0.0
        %1215 = vmatpush.msra.mxu0 0.0
        %1216 = vmatpush.msra.mxu0 0.0
        %1217 = vmatpush.msra.mxu0 %v1195
        %1218 = vmatmul.f32.gmra.mxu0 %v1200
        %v1219 = vpop.f32.mrf.mxu0
        %v1220 = vadd.f32 0.0, %v1219
        %1221 = vdwg.mxu0
        %1222 = vmatpush.msra.mxu0 0.0
        %1223 = vmatpush.msra.mxu0 0.0
        %1224 = vmatpush.msra.mxu0 0.0
        %1225 = vmatpush.msra.mxu0 0.0
        %1226 = vmatpush.msra.mxu0 0.0
        %1227 = vmatpush.msra.mxu0 0.0
        %1228 = vmatpush.msra.mxu0 0.0
        %1229 = vmatpush.msra.mxu0 0.0
        %1230 = vmatpush.msra.mxu0 0.0
        %1231 = vmatpush.msra.mxu0 0.0
        %1232 = vmatpush.msra.mxu0 0.0
        %1233 = vmatpush.msra.mxu0 0.0
        %1234 = vmatpush.msra.mxu0 0.0
        %1235 = vmatpush.msra.mxu0 0.0
        %1236 = vmatpush.msra.mxu0 0.0
        %1237 = vmatpush.msra.mxu0 %v1196
        %1238 = vmatmul.f32.gmra.mxu0 %v1200
        %v1239 = vpop.f32.mrf.mxu0
        %v1240 = vadd.f32 0.0, %v1239
        %1241 = vdwg.mxu0
        %v1242 = vadd.f32 %v1177, %v1220
        %v1243 = vadd.f32 %v1178, %v1240
        %1244 = vrot.lane.b32.xlu0 %v1179, 113
        %v1245 = vpop.permute.xlu0 %1244
        %1246 = vrot.lane.b32.xlu0 %v1180, 113
        %v1247 = vpop.permute.xlu0 %1246
        %1248 = vrot.lane.b32.xlu0 %v1181, 113
        %v1249 = vpop.permute.xlu0 %1248
        %v1250 = vsel %vm698, %v1245, %v1247
        %v1251 = vsel %vm698, %v1247, %v1249
        %v1254 = vsel %vm305, %v1250, 0.0
        %v1255 = vsel %vm306, %v1251, 0.0
        %s1256 = scalar_lea.vmem %s3, 48
        %v1257 = vld [vmem:[%s1256] sm:$0xff]
        %v1259 = vsel %vm927, %v1257, 0
        %1261 = vmatpush.msra.mxu0 0.0
        %1262 = vmatpush.msra.mxu0 0.0
        %1263 = vmatpush.msra.mxu0 0.0
        %1264 = vmatpush.msra.mxu0 0.0
        %1265 = vmatpush.msra.mxu0 0.0
        %1266 = vmatpush.msra.mxu0 0.0
        %1267 = vmatpush.msra.mxu0 0.0
        %1268 = vmatpush.msra.mxu0 0.0
        %1269 = vmatpush.msra.mxu0 0.0
        %1270 = vmatpush.msra.mxu0 0.0
        %1271 = vmatpush.msra.mxu0 0.0
        %1272 = vmatpush.msra.mxu0 0.0
        %1273 = vmatpush.msra.mxu0 0.0
        %1274 = vmatpush.msra.mxu0 0.0
        %1275 = vmatpush.msra.mxu0 0.0
        %1276 = vmatpush.msra.mxu0 %v1254
        %1277 = vmatmul.f32.gmra.mxu0 %v1259
        %v1278 = vpop.f32.mrf.mxu0
        %v1279 = vadd.f32 0.0, %v1278
        %1280 = vdwg.mxu0
        %1281 = vmatpush.msra.mxu0 0.0
        %1282 = vmatpush.msra.mxu0 0.0
        %1283 = vmatpush.msra.mxu0 0.0
        %1284 = vmatpush.msra.mxu0 0.0
        %1285 = vmatpush.msra.mxu0 0.0
        %1286 = vmatpush.msra.mxu0 0.0
        %1287 = vmatpush.msra.mxu0 0.0
        %1288 = vmatpush.msra.mxu0 0.0
        %1289 = vmatpush.msra.mxu0 0.0
        %1290 = vmatpush.msra.mxu0 0.0
        %1291 = vmatpush.msra.mxu0 0.0
        %1292 = vmatpush.msra.mxu0 0.0
        %1293 = vmatpush.msra.mxu0 0.0
        %1294 = vmatpush.msra.mxu0 0.0
        %1295 = vmatpush.msra.mxu0 0.0
        %1296 = vmatpush.msra.mxu0 %v1255
        %1297 = vmatmul.f32.gmra.mxu0 %v1259
        %v1298 = vpop.f32.mrf.mxu0
        %v1299 = vadd.f32 0.0, %v1298
        %1300 = vdwg.mxu0
        %v1301 = vadd.f32 %v1242, %v1279
        %v1302 = vadd.f32 %v1243, %v1299
        %s1303 = scalar_lea.vmem %s3, 56
        %v1304 = vld [vmem:[%s1303] sm:$0xff]
        %1305 = vrot.lane.b32.xlu0 %v1179, 112
        %v1306 = vpop.permute.xlu0 %1305
        %1307 = vrot.lane.b32.xlu0 %v1180, 112
        %v1308 = vpop.permute.xlu0 %1307
        %1309 = vrot.lane.b32.xlu0 %v1181, 112
        %v1310 = vpop.permute.xlu0 %1309
        %v1311 = vsel %vm766, %v1306, %v1308
        %v1312 = vsel %vm766, %v1308, %v1310
        %v1316 = vsel %vm927, %v1304, 0
        %1318 = vmatpush.msra.mxu0 0.0
        %1319 = vmatpush.msra.mxu0 0.0
        %1320 = vmatpush.msra.mxu0 0.0
        %1321 = vmatpush.msra.mxu0 0.0
        %1322 = vmatpush.msra.mxu0 0.0
        %1323 = vmatpush.msra.mxu0 0.0
        %1324 = vmatpush.msra.mxu0 0.0
        %1325 = vmatpush.msra.mxu0 0.0
        %1326 = vmatpush.msra.mxu0 0.0
        %1327 = vmatpush.msra.mxu0 0.0
        %1328 = vmatpush.msra.mxu0 0.0
        %1329 = vmatpush.msra.mxu0 0.0
        %1330 = vmatpush.msra.mxu0 0.0
        %1331 = vmatpush.msra.mxu0 0.0
        %1332 = vmatpush.msra.mxu0 0.0
        %1333 = vmatpush.msra.mxu0 %v1311
        %1334 = vmatmul.f32.gmra.mxu0 %v1316
        %v1335 = vpop.f32.mrf.mxu0
        %v1336 = vadd.f32 0.0, %v1335
        %1337 = vdwg.mxu0
        %1338 = vmatpush.msra.mxu0 0.0
        %1339 = vmatpush.msra.mxu0 0.0
        %1340 = vmatpush.msra.mxu0 0.0
        %1341 = vmatpush.msra.mxu0 0.0
        %1342 = vmatpush.msra.mxu0 0.0
        %1343 = vmatpush.msra.mxu0 0.0
        %1344 = vmatpush.msra.mxu0 0.0
        %1345 = vmatpush.msra.mxu0 0.0
        %1346 = vmatpush.msra.mxu0 0.0
        %1347 = vmatpush.msra.mxu0 0.0
        %1348 = vmatpush.msra.mxu0 0.0
        %1349 = vmatpush.msra.mxu0 0.0
        %1350 = vmatpush.msra.mxu0 0.0
        %1351 = vmatpush.msra.mxu0 0.0
        %1352 = vmatpush.msra.mxu0 0.0
        %1353 = vmatpush.msra.mxu0 %v1312
        %1354 = vmatmul.f32.gmra.mxu0 %v1316
        %v1355 = vpop.f32.mrf.mxu0
        %v1356 = vadd.f32 0.0, %v1355
        %1357 = vdwg.mxu0
        %v1358 = vadd.f32 %v1301, %v1336
        %v1359 = vadd.f32 %v1302, %v1356
        %1360 = vrot.lane.b32.xlu0 %v1179, 111
        %v1361 = vpop.permute.xlu0 %1360
        %1362 = vrot.lane.b32.xlu0 %v1180, 111
        %v1363 = vpop.permute.xlu0 %1362
        %1364 = vrot.lane.b32.xlu0 %v1181, 111
        %v1365 = vpop.permute.xlu0 %1364
        %v1366 = vsel %vm824, %v1361, %v1363
        %v1367 = vsel %vm824, %v1363, %v1365
        %v1370 = vsel %vm435, %v1366, 0.0
        %v1371 = vsel %vm436, %v1367, 0.0
        %s1372 = scalar_lea.vmem %s3, 64
        %v1373 = vld [vmem:[%s1372] sm:$0xff]
        %v1375 = vsel %vm927, %v1373, 0
        %1377 = vmatpush.msra.mxu0 0.0
        %1378 = vmatpush.msra.mxu0 0.0
        %1379 = vmatpush.msra.mxu0 0.0
        %1380 = vmatpush.msra.mxu0 0.0
        %1381 = vmatpush.msra.mxu0 0.0
        %1382 = vmatpush.msra.mxu0 0.0
        %1383 = vmatpush.msra.mxu0 0.0
        %1384 = vmatpush.msra.mxu0 0.0
        %1385 = vmatpush.msra.mxu0 0.0
        %1386 = vmatpush.msra.mxu0 0.0
        %1387 = vmatpush.msra.mxu0 0.0
        %1388 = vmatpush.msra.mxu0 0.0
        %1389 = vmatpush.msra.mxu0 0.0
        %1390 = vmatpush.msra.mxu0 0.0
        %1391 = vmatpush.msra.mxu0 0.0
        %1392 = vmatpush.msra.mxu0 %v1370
        %1393 = vmatmul.f32.gmra.mxu0 %v1375
        %v1394 = vpop.f32.mrf.mxu0
        %v1395 = vadd.f32 0.0, %v1394
        %1396 = vdwg.mxu0
        %1397 = vmatpush.msra.mxu0 0.0
        %1398 = vmatpush.msra.mxu0 0.0
        %1399 = vmatpush.msra.mxu0 0.0
        %1400 = vmatpush.msra.mxu0 0.0
        %1401 = vmatpush.msra.mxu0 0.0
        %1402 = vmatpush.msra.mxu0 0.0
        %1403 = vmatpush.msra.mxu0 0.0
        %1404 = vmatpush.msra.mxu0 0.0
        %1405 = vmatpush.msra.mxu0 0.0
        %1406 = vmatpush.msra.mxu0 0.0
        %1407 = vmatpush.msra.mxu0 0.0
        %1408 = vmatpush.msra.mxu0 0.0
        %1409 = vmatpush.msra.mxu0 0.0
        %1410 = vmatpush.msra.mxu0 0.0
        %1411 = vmatpush.msra.mxu0 0.0
        %1412 = vmatpush.msra.mxu0 %v1371
        %1413 = vmatmul.f32.gmra.mxu0 %v1375
        %v1414 = vpop.f32.mrf.mxu0
        %v1415 = vadd.f32 0.0, %v1414
        %1416 = vdwg.mxu0
        %v1417 = vadd.f32 %v1358, %v1395
        %v1418 = vadd.f32 %v1359, %v1415
        %v1419 = vmax.f32 %v1417, 0.0
        %v1420 = vmax.f32 %v1418, 0.0
        %v1421 = vld [vmem:[%s4] sm:$0xff]
        %1422 = vst [vmem:[#allocation1] ss:$2 sm:$0xff] %v291
        %v1423 = vld.sshfl [vmem:[#allocation1] sm:$0xff pattern:$0x75316420]
        %v1424 = vld.sshfl [vmem:[#allocation1 + $0x8] sm:$0xff pattern:$0x75316420]
        %v1426 = vsel %vm335, %v1421, 0
        %v1428 = vsel %vm339, %v1423, 0
        %v1430 = vsel %vm339, %v1424, 0
        %1432 = vmatpush.msra.mxu0 0.0
        %1433 = vmatpush.msra.mxu0 0.0
        %1434 = vmatpush.msra.mxu0 0.0
        %1435 = vmatpush.msra.mxu0 0.0
        %1436 = vmatpush.msra.mxu0 0.0
        %1437 = vmatpush.msra.mxu0 0.0
        %1438 = vmatpush.msra.mxu0 0.0
        %1439 = vmatpush.msra.mxu0 0.0
        %1440 = vmatpush.msra.mxu0 0.0
        %1441 = vmatpush.msra.mxu0 0.0
        %1442 = vmatpush.msra.mxu0 0.0
        %1443 = vmatpush.msra.mxu0 0.0
        %1444 = vmatpush.msra.mxu0 0.0
        %1445 = vmatpush.msra.mxu0 0.0
        %1446 = vmatpush.msra.mxu0 0.0
        %1447 = vmatpush.msra.mxu0 %v1428
        %1448 = vmatmul.f32.gmra.mxu0 %v1426
        %v1449 = vpop.f32.mrf.mxu0
        %v1450 = vadd.f32 0.0, %v1449
        %1451 = vdwg.mxu0
        %1452 = vmatpush.msra.mxu0 0.0
        %1453 = vmatpush.msra.mxu0 0.0
        %1454 = vmatpush.msra.mxu0 0.0
        %1455 = vmatpush.msra.mxu0 0.0
        %1456 = vmatpush.msra.mxu0 0.0
        %1457 = vmatpush.msra.mxu0 0.0
        %1458 = vmatpush.msra.mxu0 0.0
        %1459 = vmatpush.msra.mxu0 0.0
        %1460 = vmatpush.msra.mxu0 0.0
        %1461 = vmatpush.msra.mxu0 0.0
        %1462 = vmatpush.msra.mxu0 0.0
        %1463 = vmatpush.msra.mxu0 0.0
        %1464 = vmatpush.msra.mxu0 0.0
        %1465 = vmatpush.msra.mxu0 0.0
        %1466 = vmatpush.msra.mxu0 0.0
        %1467 = vmatpush.msra.mxu0 %v1430
        %1468 = vmatmul.f32.gmra.mxu0 %v1426
        %v1469 = vpop.f32.mrf.mxu0
        %v1470 = vadd.f32 0.0, %v1469
        %1471 = vdwg.mxu0
        %s1472 = sld [smem:[#allocation3]]
        %v1473 = vstv %s1472
        %v1474 = vmul.f32 %v1450, %v1473
        %v1475 = vmul.f32 %v1470, %v1473
        %v1476 = vadd.f32 %v1419, %v1474
        %v1477 = vadd.f32 %v1420, %v1475
        %vm1478 = vcmp.ge.f32.partialorder %v1476, 0.0
        %vm1479 = vcmp.ge.f32.partialorder %v1477, 0.0
        %v1480 = vmul.f32 %v1476, 0.01
        %v1481 = vmul.f32 %v1477, 0.01
        %v1482 = vsel %vm1478, %v1476, %v1480
        %v1483 = vsel %vm1479, %v1477, %v1481
        %1484 = vst [vmem:[%s245] sm:$0xff] %v1482
        %1485 = vst [vmem:[%s245 + $0x8] sm:$0xff] %v1483
        %s1486 = sand.u32 %s160, 1
        %s1487 = scalar_lea.sflag [#allocation5], %s1486
        %s1488 = sand.u32 %s160, 1
        %s1489 = smul.addr %s1488, 16
        %s1490 = scalar_lea.vmem [#allocation4], %s1489
        // Predicated region
        $region49: #{tpu_custom_call.1} parent=43 // pred_check
          %p1491 = pneg %p170
        $region50: #{tpu_custom_call.1} parent=43 // pred_check_branch
          %1493 = sbr.rel (%p1491) target = $region52
        $region51: #{tpu_custom_call.1} parent=43 // pred_region
          %1495 = vsyncadd %s1487, 0
          %s1496 = smul.addr %s21, 2
          %s1497 = smul.addr %s1496, 8
          %s1498 = scalar_lea.hbm %s6, %s1497
          %s1500 = sshll.u32 %s1490, 4
          %s1501 = int_to_ptr.vmem [resolvable:$true] %s1500
          %s1502 = sshll.u32 %s1498, 4
          %s1503 = int_to_ptr.hbm [resolvable:$true] %s1502
          %1505 = dma.vmem_to_hbm [thread:$0]  %s1501, 256, %s1503, %s1487
        $region52: #{tpu_custom_call.1} parent=43 // pred_fallthru
          _
      $region44: #{tpu_custom_call.1} parent=5 // pred_fallthru
        _
      %p1506 = scmp.le.s32.totalorder 2, %s16
      // Predicated region
      $region53: #{tpu_custom_call.1} parent=5 // pred_check
        %p1507 = pneg %p1506
      $region54: #{tpu_custom_call.1} parent=5 // pred_check_branch
        %1509 = sbr.rel (%p1507) target = $region56
      $region55: #{tpu_custom_call.1} parent=5 // pred_region
        %s1510 = ssub.s32 %s16, 2
        // Predicated region
        $region57: #{tpu_custom_call.1} parent=55 // pred_check
          %p1511 = pneg %p176
        $region58: #{tpu_custom_call.1} parent=55 // pred_check_branch
          %1513 = sbr.rel (%p1511) target = $region60
        $region59: #{tpu_custom_call.1} parent=55 // pred_region
          %s1514 = sand.u32 %s161, 1
          %s1515 = scalar_lea.sflag [#allocation5], %s1514
          %s1516 = sand.u32 %s161, 1
          %s1517 = smul.addr %s1516, 16
          %s1518 = scalar_lea.vmem [#allocation4], %s1517
          %1520 = dma.done %s1515, 256
        $region60: #{tpu_custom_call.1} parent=55 // pred_fallthru
          _
      $region56: #{tpu_custom_call.1} parent=5 // pred_fallthru
        _
    $region6: #{tpu_custom_call.1} parent=1 // loop_footer
      %s20 = sadd.s32 1, %s16
    $region7: #{tpu_custom_call.1} parent=1 // loop_footer_branch
      %15 = sbr.rel target = $region3
    $region8: #{tpu_custom_call.1} parent=1 // loop_exit
      _
    %1521 = vsyncpa [#allocation5], 1
    %s1522 = scalar_lea.sflag [#allocation5], 1
    %1523 = vsyncpa %s1522, 1

</llo_original>
